<compile_context>
chip_gen: v7x
topology: tpu7x:2x2x1
jax: 0.10.0
libtpu: 0.0.40
codegen_flags: <defaults>
</compile_context>

<pallas_src>
import functools

import jax
import jax.numpy as jnp
import numpy as np
from jax.experimental import pallas as pl
from jax.experimental.pallas import tpu as pltpu


# ---------------------------------------------------------------------------
# Straight ports of the PyTorch helpers (static / trace-time).
# ---------------------------------------------------------------------------
def digits_repr(num, base, min_digits):
    res = []
    while num:
        res.append(num % base)
        num //= base
    if len(res) < min_digits:
        res = res + [0] * (min_digits - len(res))
    res.reverse()
    return res


def valid_coeffs(n_feat, p):
    n_comb = (p + 1) ** n_feat
    pows = []
    for comb in range(1, n_comb + 1):
        pw = digits_repr(comb, base=p + 1, min_digits=n_feat)
        if 1 < sum(pw) < p + 1:
            pows.append(pw)
    return pows


def _cdiv(a, b):
    return -(-a // b)


def _round_up(v, m):
    return _cdiv(v, m) * m


# ---------------------------------------------------------------------------
# Trace-time specialization of the integer exponent table:
#   factor_d[k, b] = (S_d[k, :] @ xu[b, :]) + cst_d[k]
# where S_d[k, :] is one-hot (or zero) and cst_d[k] is 1.0 for padded factor
# slots ("constant 1" feature).  zeta[k, b] = prod_d factor_d[k, b].
# ---------------------------------------------------------------------------
def _build_selection(poly_coeffs, n_feat, d_max, pad_p):
    coeffs = np.asarray(poly_coeffs, dtype=np.int64)
    n_poly = 0 if coeffs.size == 0 else coeffs.shape[0]
    sel = np.zeros((d_max, pad_p, n_feat), dtype=np.float32)
    cst = np.zeros((d_max, pad_p), dtype=np.float32)
    for k in range(n_poly):
        factors = []
        for j in range(n_feat):
            factors.extend([j] * int(coeffs[k, j]))
        # valid_coeffs guarantees total degree <= d_max
        assert len(factors) <= d_max, "poly_coeffs total degree exceeds d_max"
        for d, j in enumerate(factors):
            sel[d, k, j] = 1.0
        for d in range(len(factors), d_max):
            cst[d, k] = 1.0  # padded factor slot contributes a constant 1
    return sel, cst


# ---------------------------------------------------------------------------
# Kernel: one stacked matmul + elementwise monomial products + one E matmul,
# everything lane-dense (batch on the lane axis).
# ---------------------------------------------------------------------------
def _poly_kernel(xuT_ref, w_ref, b_ref, e_ref, o_ref, *, d_max, pad_x, pad_p):
    xuT = xuT_ref[...]                                        # (F, bb) f32

    # Single fused MXU matmul: [Wlin ; S_0 ; ... ; S_{d_max-1}] @ xu^T  (+ bias).
    y = jnp.dot(w_ref[...], xuT,
                preferred_element_type=jnp.float32,
                precision=jax.lax.Precision.HIGHEST) + b_ref[...]   # (R, bb)

    lin = y[0:pad_x]                                          # (pad_x, bb) = [A|B] @ xu^T
    zeta = y[pad_x:pad_x + pad_p]                             # depth-0 factors
    for d in range(1, d_max):                                 # static unroll
        zeta = zeta * y[pad_x + d * pad_p: pad_x + (d + 1) * pad_p]

    dxT = lin + jnp.dot(e_ref[...], zeta,
                        preferred_element_type=jnp.float32,
                        precision=jax.lax.Precision.HIGHEST)  # (pad_x, bb)
    o_ref[...] = dxT.astype(o_ref.dtype)


# ---------------------------------------------------------------------------
# Feature-major entry point (zero relayouts).
#   xuT : (n_x + n_u, Bp) float32, batch on the lane axis, Bp % 128 == 0.
#   returns dxT_padded : (round_up(n_x, 8), Bp); rows >= n_x are zero.
# ---------------------------------------------------------------------------
def polynomial_state_update_xmajor(xuT, A_w, B_w, E_w, poly_coeffs, d_max, *,
                                   block_b=16384):
    assert d_max >= 1
    n_feat, Bp = xuT.shape
    n_x = A_w.shape[0]
    n_u = B_w.shape[1]
    assert n_feat == n_x + n_u
    assert Bp % 128 == 0, "batch lanes must be padded to a multiple of 128"

    coeffs = np.asarray(poly_coeffs, dtype=np.int64)
    n_poly = 0 if coeffs.size == 0 else coeffs.shape[0]
    pad_x = _round_up(n_x, 8)
    pad_p = _round_up(max(n_poly, 1), 8)
    R = pad_x + d_max * pad_p

    # Static one-hot selection matrices / constant-factor indicators.
    sel, cst = _build_selection(coeffs, n_feat, d_max, pad_p)

    # Stacked weight  W_all (R, F):  [ [A|B] padded to 8 rows ; S_0 ; ... ; S_{d-1} ].
    wlin = jnp.pad(jnp.concatenate([A_w, B_w], axis=1).astype(jnp.float32),
                   ((0, pad_x - n_x), (0, 0)))
    w_all = jnp.concatenate(
        [wlin, jnp.asarray(sel.reshape(d_max * pad_p, n_feat))], axis=0)
    # Stacked bias (R, 1): zeros for the linear rows, constant-1 indicators for factors.
    b_all = jnp.asarray(
        np.concatenate([np.zeros((pad_x,), np.float32),
                        cst.reshape(d_max * pad_p)])[:, None])
    # E padded to (pad_x, pad_p): padded rows/cols are zero, so padded monomial rows
    # (whatever their value) contribute nothing.
    e_pad = jnp.pad(E_w.astype(jnp.float32),
                    ((0, pad_x - n_x), (0, pad_p - n_poly)))

    # Batch tile: largest multiple of 128 <= block_b that divides Bp.
    bb = min(_round_up(block_b, 128), Bp)
    while Bp % bb:
        bb -= 128
    grid = (Bp // bb,)

    kernel = functools.partial(_poly_kernel, d_max=d_max, pad_x=pad_x, pad_p=pad_p)

    dxT = pl.pallas_call(
        kernel,
        out_shape=jax.ShapeDtypeStruct((pad_x, Bp), xuT.dtype),
        grid_spec=pltpu.PrefetchScalarGridSpec(
            num_scalar_prefetch=0,
            grid=grid,
            in_specs=[
                pl.BlockSpec((n_feat, bb), lambda i: (0, i)),   # activations (lane-dense)
                pl.BlockSpec((R, n_feat), lambda i: (0, 0)),    # stacked weight
                pl.BlockSpec((R, 1), lambda i: (0, 0)),         # stacked bias
                pl.BlockSpec((pad_x, pad_p), lambda i: (0, 0)), # padded E
            ],
            out_specs=pl.BlockSpec((pad_x, bb), lambda i: (0, i)),
        ),
        compiler_params=pltpu.CompilerParams(
            dimension_semantics=("parallel",),       # shards batch blocks across TCs (v7x)
            vmem_limit_bytes=32 * 1024 * 1024),
    )(xuT, w_all, b_all, e_pad)
    return dxT


# ---------------------------------------------------------------------------
# Batch-major adapter matching the PyTorch module layout:
#   x (B, n_x), u (B, n_u)  ->  dx (B, n_x).
# Keeps one fused XLA relayout on each side; callers that keep activations
# feature-major should use polynomial_state_update_xmajor directly.
# ---------------------------------------------------------------------------
def polynomial_state_update(x, u, A_w, B_w, E_w, poly_coeffs, d_max, *,
                            block_b=16384):
    B, n_x = x.shape
    _, n_u = u.shape

    # Tile size from a target block count -> padding bounded to <128 lanes/block.
    lanes = _round_up(B, 128)
    nblk = _cdiv(lanes, _round_up(min(block_b, lanes), 128))
    bb = _round_up(_cdiv(lanes, nblk), 128)
    Bp = nblk * bb

    xu = jnp.concatenate([x, u], axis=1).astype(jnp.float32)   # (B, F)
    if Bp != B:
        xu = jnp.pad(xu, ((0, Bp - B), (0, 0)))                # zero lanes, sliced off below
    xuT = xu.T                                                 # (F, Bp) — single fused relayout

    dxT = polynomial_state_update_xmajor(xuT, A_w, B_w, E_w, poly_coeffs, d_max,
                                         block_b=bb)
    return dxT[:n_x, :B].T.astype(x.dtype)


# ---------------------------------------------------------------------------
# Pure-numpy reference (mirrors the PyTorch forward exactly, nl_on=True).
# ---------------------------------------------------------------------------
def reference_forward(x, u, A_w, B_w, E_w, poly_coeffs):
    x = np.asarray(x, dtype=np.float64)
    u = np.asarray(u, dtype=np.float64)
    coeffs = np.asarray(poly_coeffs, dtype=np.int64)
    xu = np.concatenate([x, u], axis=-1)
    zeta = np.prod(np.power(xu[:, None, :], coeffs[None, :, :]), axis=-1)
    dx = (x @ np.asarray(A_w, np.float64).T
          + u @ np.asarray(B_w, np.float64).T
          + zeta @ np.asarray(E_w, np.float64).T)
    return dx


if __name__ == "__main__":
    # Small shapes consistent with the module.  batch=600 exercises batch padding
    # (600 -> 768 lanes) and, with block_b=512, a 2-step parallel grid.
    n_x, n_u, d_max = 4, 2, 2
    batch = 600

    pows = valid_coeffs(n_x + n_u, d_max)
    poly_coeffs = np.array(pows, dtype=np.int32)               # (21, 6)
    n_poly = poly_coeffs.shape[0]

    key = jax.random.PRNGKey(0)
    kx, ku, ka, kb, ke = jax.random.split(key, 5)

    # Deterministic parameter init (matches init_small=True std values).
    A_w = 0.001 * jax.random.normal(ka, (n_x, n_x), dtype=jnp.float32)
    B_w = 0.001 * jax.random.normal(kb, (n_x, n_u), dtype=jnp.float32)
    E_w = 1e-6 * jax.random.normal(ke, (n_x, n_poly), dtype=jnp.float32)

    x = jax.random.normal(kx, (batch, n_x), dtype=jnp.float32)
    u = jax.random.normal(ku, (batch, n_u), dtype=jnp.float32)

    dx = polynomial_state_update(x, u, A_w, B_w, E_w, poly_coeffs, d_max, block_b=512)
    dx = jax.block_until_ready(dx)

    dx_ref = reference_forward(x, u, A_w, B_w, E_w, poly_coeffs)
    np.testing.assert_allclose(np.asarray(dx), dx_ref, rtol=1e-4, atol=1e-6)

    print("KERNEL_OK")
</pallas_src>

<mosaic_0001>
module attributes {stable_mosaic.version = 11 : i64} {
  func.func @_poly_kernel(%arg0: i32, %arg1: memref<6x384xf32, #tpu.memory_space<vmem>>, %arg2: memref<56x6xf32, #tpu.memory_space<vmem>>, %arg3: memref<56x1xf32, #tpu.memory_space<vmem>>, %arg4: memref<8x24xf32, #tpu.memory_space<vmem>>, %arg5: memref<8x384xf32, #tpu.memory_space<vmem>>) attributes {dimension_semantics = [#tpu.dimension_semantics<parallel>], iteration_bounds = array<i64: 2>, scalar_prefetch = 0 : i64, scratch_operands = 0 : i64, tpu.core_type = #tpu.core_type<tc>, window_params = [{transform_indices = @transform_0, window_bounds = array<i64: 6, 384>}, {pipeline_mode = #tpu.pipeline_mode<synchronous>, transform_indices = @transform_1, window_bounds = array<i64: 56, 6>}, {pipeline_mode = #tpu.pipeline_mode<synchronous>, transform_indices = @transform_2, window_bounds = array<i64: 56, 1>}, {pipeline_mode = #tpu.pipeline_mode<synchronous>, transform_indices = @transform_3, window_bounds = array<i64: 8, 24>}, {transform_indices = @transform_4, window_bounds = array<i64: 8, 384>}]} {
    %c0 = arith.constant 0 : index
    %c0_0 = arith.constant 0 : index
    %0 = vector.load %arg1[%c0, %c0_0] : memref<6x384xf32, #tpu.memory_space<vmem>>, vector<6x384xf32>
    %c0_1 = arith.constant 0 : index
    %c0_2 = arith.constant 0 : index
    %1 = vector.load %arg2[%c0_1, %c0_2] : memref<56x6xf32, #tpu.memory_space<vmem>>, vector<56x6xf32>
    %cst = arith.constant dense<0.000000e+00> : vector<56x384xf32>
    %2 = tpu.matmul %1, %0, %cst {dimension_numbers = #tpu.dot_dimension_numbers<[1], [0], [0], [1], [0, 0, 1, 1], [], []>, precision = #tpu.contract_precision<fp32>} : vector<56x6xf32>, vector<6x384xf32>, vector<56x384xf32> -> vector<56x384xf32>
    %c0_3 = arith.constant 0 : index
    %c0_4 = arith.constant 0 : index
    %3 = vector.load %arg3[%c0_3, %c0_4] : memref<56x1xf32, #tpu.memory_space<vmem>>, vector<56x1xf32>
    %4 = vector.broadcast %3 : vector<56x1xf32> to vector<56x384xf32>
    %5 = arith.addf %2, %4 : vector<56x384xf32>
    %6 = vector.extract_strided_slice %5 {offsets = [0, 0], sizes = [8, 384], strides = [1, 1]} : vector<56x384xf32> to vector<8x384xf32>
    %7 = vector.extract_strided_slice %5 {offsets = [8, 0], sizes = [24, 384], strides = [1, 1]} : vector<56x384xf32> to vector<24x384xf32>
    %8 = vector.extract_strided_slice %5 {offsets = [32, 0], sizes = [24, 384], strides = [1, 1]} : vector<56x384xf32> to vector<24x384xf32>
    %9 = arith.mulf %7, %8 : vector<24x384xf32>
    %c0_5 = arith.constant 0 : index
    %c0_6 = arith.constant 0 : index
    %10 = vector.load %arg4[%c0_5, %c0_6] : memref<8x24xf32, #tpu.memory_space<vmem>>, vector<8x24xf32>
    %cst_7 = arith.constant dense<0.000000e+00> : vector<8x384xf32>
    %11 = tpu.matmul %10, %9, %cst_7 {dimension_numbers = #tpu.dot_dimension_numbers<[1], [0], [0], [1], [0, 0, 1, 1], [], []>, precision = #tpu.contract_precision<fp32>} : vector<8x24xf32>, vector<24x384xf32>, vector<8x384xf32> -> vector<8x384xf32>
    %12 = arith.addf %6, %11 : vector<8x384xf32>
    %c0_8 = arith.constant 0 : index
    %c0_9 = arith.constant 0 : index
    %13 = vector.load %arg5[%c0_8, %c0_9] : memref<8x384xf32, #tpu.memory_space<vmem>>, vector<8x384xf32>
    tpu.vector_store %arg5[%c0_8, %c0_9], %12 {strides = array<i32>} : memref<8x384xf32, #tpu.memory_space<vmem>>, vector<8x384xf32>,
    return
  }
  func.func @transform_0(%arg0: i32) -> (i32, i32) {
    %c0_i32 = arith.constant 0 : i32
    %c0_i32_0 = arith.constant 0 : i32
    return %c0_i32, %arg0 : i32, i32
  }
  func.func @transform_1(%arg0: i32) -> (i32, i32) {
    %c0_i32 = arith.constant 0 : i32
    %c0_i32_0 = arith.constant 0 : i32
    %c0_i32_1 = arith.constant 0 : i32
    return %c0_i32, %c0_i32_0 : i32, i32
  }
  func.func @transform_2(%arg0: i32) -> (i32, i32) {
    %c0_i32 = arith.constant 0 : i32
    %c0_i32_0 = arith.constant 0 : i32
    %c0_i32_1 = arith.constant 0 : i32
    return %c0_i32, %c0_i32_0 : i32, i32
  }
  func.func @transform_3(%arg0: i32) -> (i32, i32) {
    %c0_i32 = arith.constant 0 : i32
    %c0_i32_0 = arith.constant 0 : i32
    %c0_i32_1 = arith.constant 0 : i32
    return %c0_i32, %c0_i32_0 : i32, i32
  }
  func.func @transform_4(%arg0: i32) -> (i32, i32) {
    %c0_i32 = arith.constant 0 : i32
    %c0_i32_0 = arith.constant 0 : i32
    return %c0_i32, %arg0 : i32, i32
  }
}

</mosaic_0001>

<llo_original>
// kernel: tpu_custom_call.1
$region0: #{tpu_custom_call.1}
  #allocation0 [shape = 'u32[]', space=smem, size = 0x4, offset = 0x4, fixed_abs, tag = 'smem constant byte address 0x4 - core index']
  #allocation1 [shape = 'u32[144,128]{1,0:T(1,128)}', space=vmem, size = 0x12000, scoped, tag = 'internal scratch']
  %s0 = inlined_call_operand.vmem [shape: f32[6,768], index: 0, kind: input, shape index: {}]
  %s1 = inlined_call_operand.vmem [shape: f32[56,6], index: 1, kind: input, shape index: {}]
  %s2 = inlined_call_operand.vmem [shape: f32[56,1], index: 2, kind: input, shape index: {}]
  %s3 = inlined_call_operand.vmem [shape: f32[8,24], index: 3, kind: input, shape index: {}]
  %s4 = inlined_call_operand.hbm [shape: f32[8,768], index: 4, kind: output, shape index: {}]
  %s5 = sld [smem:[#allocation0]]
  $region49: #{tpu_custom_call.1} parent=0
    _
  %s7 = ssub.s32 1, %s5
  %s8 = scalar_select 0, %s7, %s5
  $region1: #{tpu_custom_call.1} parent=0
    #allocation2 [shape = 'u8[24576]{0}', space=vmem, size = 0x6000, scoped, tag = 'output window, operand 0']
    #allocation3 [shape = 's32[2]{0}', space=sflag, size = 0x8, scoped, tag = 'scoped memory for tpu_custom_call.1']
    %9 = vsyncpa [#allocation3], 0
    %s10 = scalar_lea.sflag [#allocation3], 1
    %11 = vsyncpa %s10, 0
    loop: start=0, step=1, limit=4
    $region2: #{tpu_custom_call.1} parent=1 // loop_pre_header
      _
    $region3: #{tpu_custom_call.1} parent=1 // loop_header
      %s13 = sphi 0, %s17
      %p14 = scmp.ge.s32.totalorder %s13, 4
      %s23 = sphi 0, %s25
      %s26 = sphi 0, %s23
      %s27 = sphi 0, %s26
      %s43 = sphi 0, %s27
      %s47 = sphi 0, %s47
      %s49 = sphi 0, %s47
      %s50 = sphi 0, %s49
      %s64 = sphi 0, %s50
      %s68 = sphi 0, %s68
      %s70 = sphi 0, %s68
      %s71 = sphi 0, %s70
      %s85 = sphi 0, %s71
      %s89 = sphi 0, %s89
      %s91 = sphi 0, %s89
      %s92 = sphi 0, %s91
      %s106 = sphi 0, %s92
      %s112 = sphi 0, %s114
      %s115 = sphi 0, %s112
      %s116 = sphi 0, %s115
      %s132 = sphi 0, %s116
    $region4: #{tpu_custom_call.1} parent=1 // loop_header_branch
      %16 = sbr.rel (%p14) target = $region8
    $region5: #{tpu_custom_call.1} parent=1 // loop_body
      %s18 = ssub.s32 %s13, 1
      %s19 = ssub.s32 %s13, 2
      %s20 = sadd.s32 %s13, 1
      %s21 = ssub.s32 %s13, %s20
      %p22 = scmp.eq.s32.totalorder %s21, 0
      %s24 = sadd.s32 %s23, 1
      %s25 = scalar_select %p22, %s23, %s24
      %p28 = pneg %p22
      %p29 = scmp.eq.s32.totalorder %s13, 1
      %p30 = por %p28, %p29
      %p31 = scmp.ne.s32.totalorder %s23, %s26
      %p32 = scmp.eq.s32.totalorder %s13, 0
      %p33 = por %p31, %p32
      %p34 = scmp.ne.s32.totalorder %s23, %s26
      %p35 = scmp.eq.s32.totalorder %s18, 1
      %p36 = por %p34, %p35
      %p37 = scmp.ne.s32.totalorder %s26, %s27
      %p38 = scmp.eq.s32.totalorder %s18, 0
      %p39 = por %p37, %p38
      %p40 = scmp.ne.s32.totalorder %s26, %s27
      %p41 = scmp.eq.s32.totalorder %s19, 1
      %p42 = por %p40, %p41
      %p44 = scmp.ne.s32.totalorder %s27, %s43
      %p45 = scmp.eq.s32.totalorder %s19, 0
      %p46 = por %p44, %p45
      %s48 = sadd.s32 %s47, 1
      %p51 = scmp.eq.s32.totalorder %s13, 1
      %p52 = scmp.ne.s32.totalorder %s47, %s49
      %p53 = scmp.eq.s32.totalorder %s13, 0
      %p54 = por %p52, %p53
      %p55 = scmp.ne.s32.totalorder %s47, %s49
      %p56 = scmp.eq.s32.totalorder %s18, 1
      %p57 = por %p55, %p56
      %p58 = scmp.ne.s32.totalorder %s49, %s50
      %p59 = scmp.eq.s32.totalorder %s18, 0
      %p60 = por %p58, %p59
      %p61 = scmp.ne.s32.totalorder %s49, %s50
      %p62 = scmp.eq.s32.totalorder %s19, 1
      %p63 = por %p61, %p62
      %p65 = scmp.ne.s32.totalorder %s50, %s64
      %p66 = scmp.eq.s32.totalorder %s19, 0
      %p67 = por %p65, %p66
      %s69 = sadd.s32 %s68, 1
      %p72 = scmp.eq.s32.totalorder %s13, 1
      %p73 = scmp.ne.s32.totalorder %s68, %s70
      %p74 = scmp.eq.s32.totalorder %s13, 0
      %p75 = por %p73, %p74
      %p76 = scmp.ne.s32.totalorder %s68, %s70
      %p77 = scmp.eq.s32.totalorder %s18, 1
      %p78 = por %p76, %p77
      %p79 = scmp.ne.s32.totalorder %s70, %s71
      %p80 = scmp.eq.s32.totalorder %s18, 0
      %p81 = por %p79, %p80
      %p82 = scmp.ne.s32.totalorder %s70, %s71
      %p83 = scmp.eq.s32.totalorder %s19, 1
      %p84 = por %p82, %p83
      %p86 = scmp.ne.s32.totalorder %s71, %s85
      %p87 = scmp.eq.s32.totalorder %s19, 0
      %p88 = por %p86, %p87
      %s90 = sadd.s32 %s89, 1
      %p93 = scmp.eq.s32.totalorder %s13, 1
      %p94 = scmp.ne.s32.totalorder %s89, %s91
      %p95 = scmp.eq.s32.totalorder %s13, 0
      %p96 = por %p94, %p95
      %p97 = scmp.ne.s32.totalorder %s89, %s91
      %p98 = scmp.eq.s32.totalorder %s18, 1
      %p99 = por %p97, %p98
      %p100 = scmp.ne.s32.totalorder %s91, %s92
      %p101 = scmp.eq.s32.totalorder %s18, 0
      %p102 = por %p100, %p101
      %p103 = scmp.ne.s32.totalorder %s91, %s92
      %p104 = scmp.eq.s32.totalorder %s19, 1
      %p105 = por %p103, %p104
      %p107 = scmp.ne.s32.totalorder %s92, %s106
      %p108 = scmp.eq.s32.totalorder %s19, 0
      %p109 = por %p107, %p108
      %s110 = ssub.s32 %s13, %s20
      %p111 = scmp.eq.s32.totalorder %s110, 0
      %s113 = sadd.s32 %s112, 1
      %s114 = scalar_select %p111, %s112, %s113
      %p117 = pneg %p111
      %p118 = scmp.eq.s32.totalorder %s13, 1
      %p119 = por %p117, %p118
      %p120 = scmp.ne.s32.totalorder %s112, %s115
      %p121 = scmp.eq.s32.totalorder %s13, 0
      %p122 = por %p120, %p121
      %p123 = scmp.ne.s32.totalorder %s112, %s115
      %p124 = scmp.eq.s32.totalorder %s18, 1
      %p125 = por %p123, %p124
      %p126 = scmp.ne.s32.totalorder %s115, %s116
      %p127 = scmp.eq.s32.totalorder %s18, 0
      %p128 = por %p126, %p127
      %p129 = scmp.ne.s32.totalorder %s115, %s116
      %p130 = scmp.eq.s32.totalorder %s19, 1
      %p131 = por %p129, %p130
      %p133 = scmp.ne.s32.totalorder %s116, %s132
      %p134 = scmp.eq.s32.totalorder %s19, 0
      %p135 = por %p133, %p134
      %p136 = scmp.le.s32.totalorder 1, %s13
      %p137 = scmp.lt.s32.totalorder %s13, 3
      %p138 = pnand %p136, %p137
      %p139 = pneg %p138
      // Predicated region
      $region9: #{tpu_custom_call.1} parent=5 // pred_check
        _
      $region10: #{tpu_custom_call.1} parent=5 // pred_check_branch
        %141 = sbr.rel (%p138) target = $region12
      $region11: #{tpu_custom_call.1} parent=5 // pred_region
        %s142 = ssub.s32 %s13, 1
        // Predicated region
        $region13: #{tpu_custom_call.1} parent=11 // pred_check
          %p143 = pneg %p60
        $region14: #{tpu_custom_call.1} parent=11 // pred_check_branch
          %145 = sbr.rel (%p143) target = $region16
        $region15: #{tpu_custom_call.1} parent=11 // pred_region
          _
        $region16: #{tpu_custom_call.1} parent=11 // pred_fallthru
          _
        // Predicated region
        $region17: #{tpu_custom_call.1} parent=11 // pred_check
          %p146 = pneg %p81
        $region18: #{tpu_custom_call.1} parent=11 // pred_check_branch
          %148 = sbr.rel (%p146) target = $region20
        $region19: #{tpu_custom_call.1} parent=11 // pred_region
          _
        $region20: #{tpu_custom_call.1} parent=11 // pred_fallthru
          _
        // Predicated region
        $region21: #{tpu_custom_call.1} parent=11 // pred_check
          %p149 = pneg %p102
        $region22: #{tpu_custom_call.1} parent=11 // pred_check_branch
          %151 = sbr.rel (%p149) target = $region24
        $region23: #{tpu_custom_call.1} parent=11 // pred_region
          _
        $region24: #{tpu_custom_call.1} parent=11 // pred_fallthru
          _
      $region12: #{tpu_custom_call.1} parent=5 // pred_fallthru
        _
      %p152 = scmp.lt.s32.totalorder %s13, 2
      // Predicated region
      $region25: #{tpu_custom_call.1} parent=5 // pred_check
        %p153 = pneg %p152
      $region26: #{tpu_custom_call.1} parent=5 // pred_check_branch
        %155 = sbr.rel (%p153) target = $region28
      $region27: #{tpu_custom_call.1} parent=5 // pred_region
        // Predicated region
        $region29: #{tpu_custom_call.1} parent=27 // pred_check
          %p156 = pneg %p33
        $region30: #{tpu_custom_call.1} parent=27 // pred_check_branch
          %158 = sbr.rel (%p156) target = $region32
        $region31: #{tpu_custom_call.1} parent=27 // pred_region
          %s159 = smul.u32 3, %s13
          %p160 = scmp.lt.s32.totalorder %s159, 5
          %s161 = scalar_select %p160, %s159, 5
          %s162 = smul.addr %s161, 8
          %s163 = scalar_lea.vmem %s0, %s162
          %s164 = smul.u32 3, %s13
        $region32: #{tpu_custom_call.1} parent=27 // pred_fallthru
          _
      $region28: #{tpu_custom_call.1} parent=5 // pred_fallthru
        _
      %p165 = scmp.le.s32.totalorder 1, %s13
      %p166 = scmp.lt.s32.totalorder %s13, 3
      %p167 = pnand %p165, %p166
      %p168 = pneg %p167
      // Predicated region
      $region33: #{tpu_custom_call.1} parent=5 // pred_check
        _
      $region34: #{tpu_custom_call.1} parent=5 // pred_check_branch
        %170 = sbr.rel (%p167) target = $region36
      $region35: #{tpu_custom_call.1} parent=5 // pred_region
        %s171 = ssub.s32 %s13, 1
        %s172 = smul.u32 3, %s18
        %p173 = scmp.lt.s32.totalorder %s172, 5
        %s174 = scalar_select %p173, %s172, 5
        %s175 = smul.addr %s174, 8
        %s176 = scalar_lea.vmem %s0, %s175
        %p177 = pneg %p39
        %p178 = pneg %p36
        %p179 = pneg %p60
        %p180 = pneg %p57
        %p181 = pneg %p81
        %p182 = pneg %p78
        %p183 = pneg %p102
        %p184 = pneg %p99
        %p185 = pneg %p128
        %p186 = pneg %p125
        %s187 = sand.u32 %s115, 1
        %s188 = scalar_lea.sflag [#allocation3], %s187
        %s189 = sand.u32 %s115, 1
        %s190 = smul.addr %s189, 24
        %s191 = scalar_lea.vmem [#allocation2], %s190
        %s192 = smul.u32 3, %s18
        %p193 = scmp.lt.s32.totalorder %s192, 5
        %s194 = scalar_select %p193, %s192, 5
        %s195 = smul.addr %s194, 8
        %s196 = scalar_lea.vmem %s0, %s195
        %s197 = smul.u32 3, %s18
        %s198 = smul.u32 3, %s18
        %v199 = vld [vmem:[%s196] sm:$0x3f]
        %v200 = vld [vmem:[%s196 + $0x8] sm:$0x3f]
        %v201 = vld [vmem:[%s196 + $0x10] sm:$0x3f]
        %v202 = vld [vmem:[%s1] sm:$0xff]
        %v203 = vld [vmem:[%s1 + $0x8] sm:$0xff]
        %v204 = vld [vmem:[%s1 + $0x10] sm:$0xff]
        %v205 = vld [vmem:[%s1 + $0x18] sm:$0xff]
        %v206 = vld [vmem:[%s1 + $0x20] sm:$0xff]
        %v207 = vld [vmem:[%s1 + $0x28] sm:$0xff]
        %v208 = vld [vmem:[%s1 + $0x30] sm:$0xff]
        %v209 = vld [vmem:[%s2] sm:$0xff]
        %v210 = vld [vmem:[%s2 + $0x8] sm:$0xff]
        %v211 = vld [vmem:[%s2 + $0x10] sm:$0xff]
        %v212 = vld [vmem:[%s2 + $0x18] sm:$0xff]
        %v213 = vld [vmem:[%s2 + $0x20] sm:$0xff]
        %v214 = vld [vmem:[%s2 + $0x28] sm:$0xff]
        %v215 = vld [vmem:[%s2 + $0x30] sm:$0xff]
        %217 = vset.pattern.permute.xlu0 0
        %218 = vperm.xlu0 %217, %v209
        %v219 = vpop.permute.xlu0 %218
        %222 = vset.pattern.permute.xlu0 0
        %223 = vperm.xlu0 %222, %v210
        %v224 = vpop.permute.xlu0 %223
        %227 = vset.pattern.permute.xlu0 0
        %228 = vperm.xlu0 %227, %v211
        %v229 = vpop.permute.xlu0 %228
        %232 = vset.pattern.permute.xlu0 0
        %233 = vperm.xlu0 %232, %v212
        %v234 = vpop.permute.xlu0 %233
        %237 = vset.pattern.permute.xlu0 0
        %238 = vperm.xlu0 %237, %v213
        %v239 = vpop.permute.xlu0 %238
        %242 = vset.pattern.permute.xlu0 0
        %243 = vperm.xlu0 %242, %v214
        %v244 = vpop.permute.xlu0 %243
        %247 = vset.pattern.permute.xlu0 0
        %248 = vperm.xlu0 %247, %v215
        %v249 = vpop.permute.xlu0 %248
        %vm251 = vcmask 48128
        %v253 = vsel %vm251, %v202, 0
        %v256 = vsel %vm251, %v203, 0
        %v259 = vsel %vm251, %v204, 0
        %v262 = vsel %vm251, %v205, 0
        %v265 = vsel %vm251, %v206, 0
        %v268 = vsel %vm251, %v207, 0
        %v271 = vsel %vm251, %v208, 0
        %vm273 = vcmask 1045504
        %v275 = vsel %vm273, %v199, 0
        %v278 = vsel %vm273, %v200, 0
        %v281 = vsel %vm273, %v201, 0
        %v283 = vand.u32 %v278, 4294901760
        %284 = vmatprep.subr.mxu0 %v283
        %v285 = vand.u32 %v275, 4294901760
        %286 = vmatpush1.msra.mxu0 %v285
        %287 = vmatprep.subr.mxu0 0.0
        %288 = vmatpush1.msra.mxu0 0.0
        %289 = vmatprep.subr.mxu0 0.0
        %290 = vmatpush1.msra.mxu0 0.0
        %291 = vmatprep.subr.mxu0 0.0
        %292 = vmatpush1.msra.mxu0 0.0
        %293 = vmatprep.subr.mxu0 0.0
        %294 = vmatpush1.msra.mxu0 0.0
        %295 = vmatprep.subr.mxu0 0.0
        %296 = vmatpush1.msra.mxu0 0.0
        %297 = vmatprep.subr.mxu0 0.0
        %298 = vmatpush1.msra.mxu0 0.0
        %299 = vmatprep.subr.mxu0 0.0
        %300 = vmatpush1.msra.mxu0 0.0
        %301 = vmatprep.subr.mxu0 0.0
        %302 = vmatpush1.msra.mxu0 0.0
        %303 = vmatprep.subr.mxu0 0.0
        %304 = vmatpush1.msra.mxu0 0.0
        %305 = vmatprep.subr.mxu0 0.0
        %306 = vmatpush1.msra.mxu0 0.0
        %307 = vmatprep.subr.mxu0 0.0
        %308 = vmatpush1.msra.mxu0 0.0
        %309 = vmatprep.subr.mxu0 0.0
        %310 = vmatpush1.msra.mxu0 0.0
        %311 = vmatprep.subr.mxu0 0.0
        %312 = vmatpush1.msra.mxu0 0.0
        %313 = vmatprep.subr.mxu0 0.0
        %314 = vmatpush1.msra.mxu0 0.0
        %315 = vmatprep.subr.mxu0 0.0
        %316 = vmatpush1.msra.mxu0 0.0
        %317 = vmatprep.subr.mxu0 0.0
        %318 = vmatpush1.msra.mxu0 0.0
        %319 = vmatprep.subr.mxu0 0.0
        %320 = vmatpush1.msra.mxu0 0.0
        %321 = vmatprep.subr.mxu0 0.0
        %322 = vmatpush1.msra.mxu0 0.0
        %323 = vmatprep.subr.mxu0 0.0
        %324 = vmatpush1.msra.mxu0 0.0
        %325 = vmatprep.subr.mxu0 0.0
        %326 = vmatpush1.msra.mxu0 0.0
        %327 = vmatprep.subr.mxu0 0.0
        %328 = vmatpush1.msra.mxu0 0.0
        %329 = vmatprep.subr.mxu0 0.0
        %330 = vmatpush1.msra.mxu0 0.0
        %331 = vmatprep.subr.mxu0 0.0
        %332 = vmatpush1.msra.mxu0 0.0
        %333 = vmatprep.subr.mxu0 0.0
        %334 = vmatpush1.msra.mxu0 0.0
        %335 = vmatprep.subr.mxu0 0.0
        %336 = vmatpush1.msra.mxu0 0.0
        %337 = vmatprep.subr.mxu0 0.0
        %338 = vmatpush1.msra.mxu0 0.0
        %339 = vmatprep.subr.mxu0 0.0
        %340 = vmatpush1.msra.mxu0 0.0
        %341 = vmatprep.subr.mxu0 0.0
        %342 = vmatpush1.msra.mxu0 0.0
        %343 = vmatprep.subr.mxu0 0.0
        %344 = vmatpush1.msra.mxu0 0.0
        %345 = vmatprep.subr.mxu0 0.0
        %346 = vmatpush1.msra.mxu0 0.0
        %347 = vmatprep.subr.mxu0 0.0
        %348 = vmatpush1.msra.mxu0 0.0
        %349 = vmatprep.mubr.f32.mxu0 0.0
        %v350 = vand.u32 %v253, 4294901760
        %v351 = vsub.f32 %v253, %v350
        %v352 = vand.u32 %v351, 4294901760
        %v353 = vsub.f32 %v351, %v352
        %v354 = vand.u32 %v353, 4294901760
        %355 = vmatmul.mubr.f32.gmra.mrb[0].mxu0 %v354
        %v356 = vpop.f32.mrb[0].mxu0
        %v357 = vadd.f32 %v219, %v356
        %v358 = vpop.f32.mrb[0].mxu0
        %v359 = vadd.f32 %v219, %v358
        %360 = vmatprep.mubr.f32.mxu0 0.0
        %v361 = vand.u32 %v256, 4294901760
        %v362 = vsub.f32 %v256, %v361
        %v363 = vand.u32 %v362, 4294901760
        %v364 = vsub.f32 %v362, %v363
        %v365 = vand.u32 %v364, 4294901760
        %366 = vmatmul.mubr.f32.gmra.mrb[0].mxu0 %v365
        %v367 = vpop.f32.mrb[0].mxu0
        %v368 = vadd.f32 %v224, %v367
        %v369 = vpop.f32.mrb[0].mxu0
        %v370 = vadd.f32 %v224, %v369
        %371 = vmatprep.mubr.f32.mxu0 0.0
        %v372 = vand.u32 %v259, 4294901760
        %v373 = vsub.f32 %v259, %v372
        %v374 = vand.u32 %v373, 4294901760
        %v375 = vsub.f32 %v373, %v374
        %v376 = vand.u32 %v375, 4294901760
        %377 = vmatmul.mubr.f32.gmra.mrb[0].mxu0 %v376
        %v378 = vpop.f32.mrb[0].mxu0
        %v379 = vadd.f32 %v229, %v378
        %v380 = vpop.f32.mrb[0].mxu0
        %v381 = vadd.f32 %v229, %v380
        %382 = vmatprep.mubr.f32.mxu0 0.0
        %v383 = vand.u32 %v262, 4294901760
        %v384 = vsub.f32 %v262, %v383
        %v385 = vand.u32 %v384, 4294901760
        %v386 = vsub.f32 %v384, %v385
        %v387 = vand.u32 %v386, 4294901760
        %388 = vmatmul.mubr.f32.gmra.mrb[0].mxu0 %v387
        %v389 = vpop.f32.mrb[0].mxu0
        %v390 = vadd.f32 %v234, %v389
        %v391 = vpop.f32.mrb[0].mxu0
        %v392 = vadd.f32 %v234, %v391
        %393 = vmatprep.mubr.f32.mxu0 0.0
        %v394 = vand.u32 %v265, 4294901760
        %v395 = vsub.f32 %v265, %v394
        %v396 = vand.u32 %v395, 4294901760
        %v397 = vsub.f32 %v395, %v396
        %v398 = vand.u32 %v397, 4294901760
        %399 = vmatmul.mubr.f32.gmra.mrb[0].mxu0 %v398
        %v400 = vpop.f32.mrb[0].mxu0
        %v401 = vadd.f32 %v239, %v400
        %v402 = vpop.f32.mrb[0].mxu0
        %v403 = vadd.f32 %v239, %v402
        %404 = vmatprep.mubr.f32.mxu0 0.0
        %v405 = vand.u32 %v268, 4294901760
        %v406 = vsub.f32 %v268, %v405
        %v407 = vand.u32 %v406, 4294901760
        %v408 = vsub.f32 %v406, %v407
        %v409 = vand.u32 %v408, 4294901760
        %410 = vmatmul.mubr.f32.gmra.mrb[0].mxu0 %v409
        %v411 = vpop.f32.mrb[0].mxu0
        %v412 = vadd.f32 %v244, %v411
        %v413 = vpop.f32.mrb[0].mxu0
        %v414 = vadd.f32 %v244, %v413
        %415 = vmatprep.mubr.f32.mxu0 0.0
        %v416 = vand.u32 %v271, 4294901760
        %v417 = vsub.f32 %v271, %v416
        %v418 = vand.u32 %v417, 4294901760
        %v419 = vsub.f32 %v417, %v418
        %v420 = vand.u32 %v419, 4294901760
        %421 = vmatmul.mubr.f32.gmra.mrb[0].mxu0 %v420
        %v422 = vpop.f32.mrb[0].mxu0
        %v423 = vadd.f32 %v249, %v422
        %v424 = vpop.f32.mrb[0].mxu0
        %v425 = vadd.f32 %v249, %v424
        %426 = vdwg.mxu0
        %v427 = vand.u32 %v278, 4294901760
        %v428 = vsub.f32 %v278, %v427
        %v429 = vand.u32 %v428, 4294901760
        %v430 = vsub.f32 %v428, %v429
        %v431 = vand.u32 %v430, 4294901760
        %432 = vmatprep.subr.mxu0 %v431
        %v433 = vand.u32 %v275, 4294901760
        %v434 = vsub.f32 %v275, %v433
        %v435 = vand.u32 %v434, 4294901760
        %v436 = vsub.f32 %v434, %v435
        %v437 = vand.u32 %v436, 4294901760
        %438 = vmatpush1.msra.mxu0 %v437
        %439 = vmatprep.subr.mxu0 0.0
        %440 = vmatpush1.msra.mxu0 0.0
        %441 = vmatprep.subr.mxu0 0.0
        %442 = vmatpush1.msra.mxu0 0.0
        %443 = vmatprep.subr.mxu0 0.0
        %444 = vmatpush1.msra.mxu0 0.0
        %445 = vmatprep.subr.mxu0 0.0
        %446 = vmatpush1.msra.mxu0 0.0
        %447 = vmatprep.subr.mxu0 0.0
        %448 = vmatpush1.msra.mxu0 0.0
        %449 = vmatprep.subr.mxu0 0.0
        %450 = vmatpush1.msra.mxu0 0.0
        %451 = vmatprep.subr.mxu0 0.0
        %452 = vmatpush1.msra.mxu0 0.0
        %453 = vmatprep.subr.mxu0 0.0
        %454 = vmatpush1.msra.mxu0 0.0
        %455 = vmatprep.subr.mxu0 0.0
        %456 = vmatpush1.msra.mxu0 0.0
        %457 = vmatprep.subr.mxu0 0.0
        %458 = vmatpush1.msra.mxu0 0.0
        %459 = vmatprep.subr.mxu0 0.0
        %460 = vmatpush1.msra.mxu0 0.0
        %461 = vmatprep.subr.mxu0 0.0
        %462 = vmatpush1.msra.mxu0 0.0
        %463 = vmatprep.subr.mxu0 0.0
        %464 = vmatpush1.msra.mxu0 0.0
        %465 = vmatprep.subr.mxu0 0.0
        %466 = vmatpush1.msra.mxu0 0.0
        %467 = vmatprep.subr.mxu0 0.0
        %468 = vmatpush1.msra.mxu0 0.0
        %469 = vmatprep.subr.mxu0 0.0
        %470 = vmatpush1.msra.mxu0 0.0
        %471 = vmatprep.subr.mxu0 0.0
        %472 = vmatpush1.msra.mxu0 0.0
        %473 = vmatprep.subr.mxu0 0.0
        %474 = vmatpush1.msra.mxu0 0.0
        %475 = vmatprep.subr.mxu0 0.0
        %476 = vmatpush1.msra.mxu0 0.0
        %477 = vmatprep.subr.mxu0 0.0
        %478 = vmatpush1.msra.mxu0 0.0
        %479 = vmatprep.subr.mxu0 0.0
        %480 = vmatpush1.msra.mxu0 0.0
        %481 = vmatprep.subr.mxu0 0.0
        %482 = vmatpush1.msra.mxu0 0.0
        %483 = vmatprep.subr.mxu0 0.0
        %484 = vmatpush1.msra.mxu0 0.0
        %485 = vmatprep.subr.mxu0 0.0
        %486 = vmatpush1.msra.mxu0 0.0
        %487 = vmatprep.subr.mxu0 0.0
        %488 = vmatpush1.msra.mxu0 0.0
        %489 = vmatprep.subr.mxu0 0.0
        %490 = vmatpush1.msra.mxu0 0.0
        %491 = vmatprep.subr.mxu0 0.0
        %492 = vmatpush1.msra.mxu0 0.0
        %493 = vmatprep.subr.mxu0 0.0
        %494 = vmatpush1.msra.mxu0 0.0
        %495 = vmatprep.subr.mxu0 0.0
        %496 = vmatpush1.msra.mxu0 0.0
        %497 = vmatprep.subr.mxu0 0.0
        %498 = vmatpush1.msra.mxu0 0.0
        %499 = vmatprep.subr.mxu0 0.0
        %500 = vmatpush1.msra.mxu0 0.0
        %501 = vmatprep.mubr.f32.mxu0 0.0
        %v502 = vand.u32 %v253, 4294901760
        %503 = vmatmul.mubr.f32.gmra.mrb[0].mxu0 %v502
        %v504 = vpop.f32.mrb[0].mxu0
        %v505 = vadd.f32 %v357, %v504
        %v506 = vpop.f32.mrb[0].mxu0
        %v507 = vadd.f32 %v359, %v506
        %508 = vmatprep.mubr.f32.mxu0 0.0
        %v509 = vand.u32 %v256, 4294901760
        %510 = vmatmul.mubr.f32.gmra.mrb[0].mxu0 %v509
        %v511 = vpop.f32.mrb[0].mxu0
        %v512 = vadd.f32 %v368, %v511
        %v513 = vpop.f32.mrb[0].mxu0
        %v514 = vadd.f32 %v370, %v513
        %515 = vmatprep.mubr.f32.mxu0 0.0
        %v516 = vand.u32 %v259, 4294901760
        %517 = vmatmul.mubr.f32.gmra.mrb[0].mxu0 %v516
        %v518 = vpop.f32.mrb[0].mxu0
        %v519 = vadd.f32 %v379, %v518
        %v520 = vpop.f32.mrb[0].mxu0
        %v521 = vadd.f32 %v381, %v520
        %522 = vmatprep.mubr.f32.mxu0 0.0
        %v523 = vand.u32 %v262, 4294901760
        %524 = vmatmul.mubr.f32.gmra.mrb[0].mxu0 %v523
        %v525 = vpop.f32.mrb[0].mxu0
        %v526 = vadd.f32 %v390, %v525
        %v527 = vpop.f32.mrb[0].mxu0
        %v528 = vadd.f32 %v392, %v527
        %529 = vmatprep.mubr.f32.mxu0 0.0
        %v530 = vand.u32 %v265, 4294901760
        %531 = vmatmul.mubr.f32.gmra.mrb[0].mxu0 %v530
        %v532 = vpop.f32.mrb[0].mxu0
        %v533 = vadd.f32 %v401, %v532
        %v534 = vpop.f32.mrb[0].mxu0
        %v535 = vadd.f32 %v403, %v534
        %536 = vmatprep.mubr.f32.mxu0 0.0
        %v537 = vand.u32 %v268, 4294901760
        %538 = vmatmul.mubr.f32.gmra.mrb[0].mxu0 %v537
        %v539 = vpop.f32.mrb[0].mxu0
        %v540 = vadd.f32 %v412, %v539
        %v541 = vpop.f32.mrb[0].mxu0
        %v542 = vadd.f32 %v414, %v541
        %543 = vmatprep.mubr.f32.mxu0 0.0
        %v544 = vand.u32 %v271, 4294901760
        %545 = vmatmul.mubr.f32.gmra.mrb[0].mxu0 %v544
        %v546 = vpop.f32.mrb[0].mxu0
        %v547 = vadd.f32 %v423, %v546
        %v548 = vpop.f32.mrb[0].mxu0
        %v549 = vadd.f32 %v425, %v548
        %550 = vdwg.mxu0
        %v551 = vand.u32 %v278, 4294901760
        %v552 = vsub.f32 %v278, %v551
        %553 = vmatprep.subr.mxu0 %v552
        %v554 = vand.u32 %v275, 4294901760
        %v555 = vsub.f32 %v275, %v554
        %556 = vmatpush1.msra.mxu0 %v555
        %557 = vmatprep.subr.mxu0 0.0
        %558 = vmatpush1.msra.mxu0 0.0
        %559 = vmatprep.subr.mxu0 0.0
        %560 = vmatpush1.msra.mxu0 0.0
        %561 = vmatprep.subr.mxu0 0.0
        %562 = vmatpush1.msra.mxu0 0.0
        %563 = vmatprep.subr.mxu0 0.0
        %564 = vmatpush1.msra.mxu0 0.0
        %565 = vmatprep.subr.mxu0 0.0
        %566 = vmatpush1.msra.mxu0 0.0
        %567 = vmatprep.subr.mxu0 0.0
        %568 = vmatpush1.msra.mxu0 0.0
        %569 = vmatprep.subr.mxu0 0.0
        %570 = vmatpush1.msra.mxu0 0.0
        %571 = vmatprep.subr.mxu0 0.0
        %572 = vmatpush1.msra.mxu0 0.0
        %573 = vmatprep.subr.mxu0 0.0
        %574 = vmatpush1.msra.mxu0 0.0
        %575 = vmatprep.subr.mxu0 0.0
        %576 = vmatpush1.msra.mxu0 0.0
        %577 = vmatprep.subr.mxu0 0.0
        %578 = vmatpush1.msra.mxu0 0.0
        %579 = vmatprep.subr.mxu0 0.0
        %580 = vmatpush1.msra.mxu0 0.0
        %581 = vmatprep.subr.mxu0 0.0
        %582 = vmatpush1.msra.mxu0 0.0
        %583 = vmatprep.subr.mxu0 0.0
        %584 = vmatpush1.msra.mxu0 0.0
        %585 = vmatprep.subr.mxu0 0.0
        %586 = vmatpush1.msra.mxu0 0.0
        %587 = vmatprep.subr.mxu0 0.0
        %588 = vmatpush1.msra.mxu0 0.0
        %589 = vmatprep.subr.mxu0 0.0
        %590 = vmatpush1.msra.mxu0 0.0
        %591 = vmatprep.subr.mxu0 0.0
        %592 = vmatpush1.msra.mxu0 0.0
        %593 = vmatprep.subr.mxu0 0.0
        %594 = vmatpush1.msra.mxu0 0.0
        %595 = vmatprep.subr.mxu0 0.0
        %596 = vmatpush1.msra.mxu0 0.0
        %597 = vmatprep.subr.mxu0 0.0
        %598 = vmatpush1.msra.mxu0 0.0
        %599 = vmatprep.subr.mxu0 0.0
        %600 = vmatpush1.msra.mxu0 0.0
        %601 = vmatprep.subr.mxu0 0.0
        %602 = vmatpush1.msra.mxu0 0.0
        %603 = vmatprep.subr.mxu0 0.0
        %604 = vmatpush1.msra.mxu0 0.0
        %605 = vmatprep.subr.mxu0 0.0
        %606 = vmatpush1.msra.mxu0 0.0
        %607 = vmatprep.subr.mxu0 0.0
        %608 = vmatpush1.msra.mxu0 0.0
        %609 = vmatprep.subr.mxu0 0.0
        %610 = vmatpush1.msra.mxu0 0.0
        %611 = vmatprep.subr.mxu0 0.0
        %612 = vmatpush1.msra.mxu0 0.0
        %613 = vmatprep.subr.mxu0 0.0
        %614 = vmatpush1.msra.mxu0 0.0
        %615 = vmatprep.subr.mxu0 0.0
        %616 = vmatpush1.msra.mxu0 0.0
        %617 = vmatprep.subr.mxu0 0.0
        %618 = vmatpush1.msra.mxu0 0.0
        %619 = vmatprep.mubr.f32.mxu0 0.0
        %v620 = vand.u32 %v253, 4294901760
        %v621 = vsub.f32 %v253, %v620
        %622 = vmatmul.mubr.f32.gmra.mrb[0].mxu0 %v621
        %v623 = vpop.f32.mrb[0].mxu0
        %v624 = vadd.f32 %v505, %v623
        %v625 = vpop.f32.mrb[0].mxu0
        %v626 = vadd.f32 %v507, %v625
        %627 = vmatprep.mubr.f32.mxu0 0.0
        %v628 = vand.u32 %v256, 4294901760
        %v629 = vsub.f32 %v256, %v628
        %630 = vmatmul.mubr.f32.gmra.mrb[0].mxu0 %v629
        %v631 = vpop.f32.mrb[0].mxu0
        %v632 = vadd.f32 %v512, %v631
        %v633 = vpop.f32.mrb[0].mxu0
        %v634 = vadd.f32 %v514, %v633
        %635 = vmatprep.mubr.f32.mxu0 0.0
        %v636 = vand.u32 %v259, 4294901760
        %v637 = vsub.f32 %v259, %v636
        %638 = vmatmul.mubr.f32.gmra.mrb[0].mxu0 %v637
        %v639 = vpop.f32.mrb[0].mxu0
        %v640 = vadd.f32 %v519, %v639
        %v641 = vpop.f32.mrb[0].mxu0
        %v642 = vadd.f32 %v521, %v641
        %643 = vmatprep.mubr.f32.mxu0 0.0
        %v644 = vand.u32 %v262, 4294901760
        %v645 = vsub.f32 %v262, %v644
        %646 = vmatmul.mubr.f32.gmra.mrb[0].mxu0 %v645
        %v647 = vpop.f32.mrb[0].mxu0
        %v648 = vadd.f32 %v526, %v647
        %v649 = vpop.f32.mrb[0].mxu0
        %v650 = vadd.f32 %v528, %v649
        %651 = vmatprep.mubr.f32.mxu0 0.0
        %v652 = vand.u32 %v265, 4294901760
        %v653 = vsub.f32 %v265, %v652
        %654 = vmatmul.mubr.f32.gmra.mrb[0].mxu0 %v653
        %v655 = vpop.f32.mrb[0].mxu0
        %v656 = vadd.f32 %v533, %v655
        %v657 = vpop.f32.mrb[0].mxu0
        %v658 = vadd.f32 %v535, %v657
        %659 = vmatprep.mubr.f32.mxu0 0.0
        %v660 = vand.u32 %v268, 4294901760
        %v661 = vsub.f32 %v268, %v660
        %662 = vmatmul.mubr.f32.gmra.mrb[0].mxu0 %v661
        %v663 = vpop.f32.mrb[0].mxu0
        %v664 = vadd.f32 %v540, %v663
        %v665 = vpop.f32.mrb[0].mxu0
        %v666 = vadd.f32 %v542, %v665
        %667 = vmatprep.mubr.f32.mxu0 0.0
        %v668 = vand.u32 %v271, 4294901760
        %v669 = vsub.f32 %v271, %v668
        %670 = vmatmul.mubr.f32.gmra.mrb[0].mxu0 %v669
        %v671 = vpop.f32.mrb[0].mxu0
        %v672 = vadd.f32 %v547, %v671
        %v673 = vpop.f32.mrb[0].mxu0
        %v674 = vadd.f32 %v549, %v673
        %675 = vdwg.mxu0
        %v676 = vand.u32 %v278, 4294901760
        %677 = vmatprep.subr.mxu0 %v676
        %v678 = vand.u32 %v275, 4294901760
        %679 = vmatpush1.msra.mxu0 %v678
        %680 = vmatprep.subr.mxu0 0.0
        %681 = vmatpush1.msra.mxu0 0.0
        %682 = vmatprep.subr.mxu0 0.0
        %683 = vmatpush1.msra.mxu0 0.0
        %684 = vmatprep.subr.mxu0 0.0
        %685 = vmatpush1.msra.mxu0 0.0
        %686 = vmatprep.subr.mxu0 0.0
        %687 = vmatpush1.msra.mxu0 0.0
        %688 = vmatprep.subr.mxu0 0.0
        %689 = vmatpush1.msra.mxu0 0.0
        %690 = vmatprep.subr.mxu0 0.0
        %691 = vmatpush1.msra.mxu0 0.0
        %692 = vmatprep.subr.mxu0 0.0
        %693 = vmatpush1.msra.mxu0 0.0
        %694 = vmatprep.subr.mxu0 0.0
        %695 = vmatpush1.msra.mxu0 0.0
        %696 = vmatprep.subr.mxu0 0.0
        %697 = vmatpush1.msra.mxu0 0.0
        %698 = vmatprep.subr.mxu0 0.0
        %699 = vmatpush1.msra.mxu0 0.0
        %700 = vmatprep.subr.mxu0 0.0
        %701 = vmatpush1.msra.mxu0 0.0
        %702 = vmatprep.subr.mxu0 0.0
        %703 = vmatpush1.msra.mxu0 0.0
        %704 = vmatprep.subr.mxu0 0.0
        %705 = vmatpush1.msra.mxu0 0.0
        %706 = vmatprep.subr.mxu0 0.0
        %707 = vmatpush1.msra.mxu0 0.0
        %708 = vmatprep.subr.mxu0 0.0
        %709 = vmatpush1.msra.mxu0 0.0
        %710 = vmatprep.subr.mxu0 0.0
        %711 = vmatpush1.msra.mxu0 0.0
        %712 = vmatprep.subr.mxu0 0.0
        %713 = vmatpush1.msra.mxu0 0.0
        %714 = vmatprep.subr.mxu0 0.0
        %715 = vmatpush1.msra.mxu0 0.0
        %716 = vmatprep.subr.mxu0 0.0
        %717 = vmatpush1.msra.mxu0 0.0
        %718 = vmatprep.subr.mxu0 0.0
        %719 = vmatpush1.msra.mxu0 0.0
        %720 = vmatprep.subr.mxu0 0.0
        %721 = vmatpush1.msra.mxu0 0.0
        %722 = vmatprep.subr.mxu0 0.0
        %723 = vmatpush1.msra.mxu0 0.0
        %724 = vmatprep.subr.mxu0 0.0
        %725 = vmatpush1.msra.mxu0 0.0
        %726 = vmatprep.subr.mxu0 0.0
        %727 = vmatpush1.msra.mxu0 0.0
        %728 = vmatprep.subr.mxu0 0.0
        %729 = vmatpush1.msra.mxu0 0.0
        %730 = vmatprep.subr.mxu0 0.0
        %731 = vmatpush1.msra.mxu0 0.0
        %732 = vmatprep.subr.mxu0 0.0
        %733 = vmatpush1.msra.mxu0 0.0
        %734 = vmatprep.subr.mxu0 0.0
        %735 = vmatpush1.msra.mxu0 0.0
        %736 = vmatprep.subr.mxu0 0.0
        %737 = vmatpush1.msra.mxu0 0.0
        %738 = vmatprep.subr.mxu0 0.0
        %739 = vmatpush1.msra.mxu0 0.0
        %740 = vmatprep.subr.mxu0 0.0
        %741 = vmatpush1.msra.mxu0 0.0
        %742 = vmatprep.mubr.f32.mxu0 0.0
        %v743 = vand.u32 %v253, 4294901760
        %v744 = vsub.f32 %v253, %v743
        %v745 = vand.u32 %v744, 4294901760
        %746 = vmatmul.mubr.f32.gmra.mrb[0].mxu0 %v745
        %v747 = vpop.f32.mrb[0].mxu0
        %v748 = vadd.f32 %v624, %v747
        %v749 = vpop.f32.mrb[0].mxu0
        %v750 = vadd.f32 %v626, %v749
        %751 = vmatprep.mubr.f32.mxu0 0.0
        %v752 = vand.u32 %v256, 4294901760
        %v753 = vsub.f32 %v256, %v752
        %v754 = vand.u32 %v753, 4294901760
        %755 = vmatmul.mubr.f32.gmra.mrb[0].mxu0 %v754
        %v756 = vpop.f32.mrb[0].mxu0
        %v757 = vadd.f32 %v632, %v756
        %v758 = vpop.f32.mrb[0].mxu0
        %v759 = vadd.f32 %v634, %v758
        %760 = vmatprep.mubr.f32.mxu0 0.0
        %v761 = vand.u32 %v259, 4294901760
        %v762 = vsub.f32 %v259, %v761
        %v763 = vand.u32 %v762, 4294901760
        %764 = vmatmul.mubr.f32.gmra.mrb[0].mxu0 %v763
        %v765 = vpop.f32.mrb[0].mxu0
        %v766 = vadd.f32 %v640, %v765
        %v767 = vpop.f32.mrb[0].mxu0
        %v768 = vadd.f32 %v642, %v767
        %769 = vmatprep.mubr.f32.mxu0 0.0
        %v770 = vand.u32 %v262, 4294901760
        %v771 = vsub.f32 %v262, %v770
        %v772 = vand.u32 %v771, 4294901760
        %773 = vmatmul.mubr.f32.gmra.mrb[0].mxu0 %v772
        %v774 = vpop.f32.mrb[0].mxu0
        %v775 = vadd.f32 %v648, %v774
        %v776 = vpop.f32.mrb[0].mxu0
        %v777 = vadd.f32 %v650, %v776
        %778 = vmatprep.mubr.f32.mxu0 0.0
        %v779 = vand.u32 %v265, 4294901760
        %v780 = vsub.f32 %v265, %v779
        %v781 = vand.u32 %v780, 4294901760
        %782 = vmatmul.mubr.f32.gmra.mrb[0].mxu0 %v781
        %v783 = vpop.f32.mrb[0].mxu0
        %v784 = vadd.f32 %v656, %v783
        %v785 = vpop.f32.mrb[0].mxu0
        %v786 = vadd.f32 %v658, %v785
        %787 = vmatprep.mubr.f32.mxu0 0.0
        %v788 = vand.u32 %v268, 4294901760
        %v789 = vsub.f32 %v268, %v788
        %v790 = vand.u32 %v789, 4294901760
        %791 = vmatmul.mubr.f32.gmra.mrb[0].mxu0 %v790
        %v792 = vpop.f32.mrb[0].mxu0
        %v793 = vadd.f32 %v664, %v792
        %v794 = vpop.f32.mrb[0].mxu0
        %v795 = vadd.f32 %v666, %v794
        %796 = vmatprep.mubr.f32.mxu0 0.0
        %v797 = vand.u32 %v271, 4294901760
        %v798 = vsub.f32 %v271, %v797
        %v799 = vand.u32 %v798, 4294901760
        %800 = vmatmul.mubr.f32.gmra.mrb[0].mxu0 %v799
        %v801 = vpop.f32.mrb[0].mxu0
        %v802 = vadd.f32 %v672, %v801
        %v803 = vpop.f32.mrb[0].mxu0
        %v804 = vadd.f32 %v674, %v803
        %805 = vdwg.mxu0
        %v806 = vand.u32 %v278, 4294901760
        %v807 = vsub.f32 %v278, %v806
        %v808 = vand.u32 %v807, 4294901760
        %809 = vmatprep.subr.mxu0 %v808
        %v810 = vand.u32 %v275, 4294901760
        %v811 = vsub.f32 %v275, %v810
        %v812 = vand.u32 %v811, 4294901760
        %813 = vmatpush1.msra.mxu0 %v812
        %814 = vmatprep.subr.mxu0 0.0
        %815 = vmatpush1.msra.mxu0 0.0
        %816 = vmatprep.subr.mxu0 0.0
        %817 = vmatpush1.msra.mxu0 0.0
        %818 = vmatprep.subr.mxu0 0.0
        %819 = vmatpush1.msra.mxu0 0.0
        %820 = vmatprep.subr.mxu0 0.0
        %821 = vmatpush1.msra.mxu0 0.0
        %822 = vmatprep.subr.mxu0 0.0
        %823 = vmatpush1.msra.mxu0 0.0
        %824 = vmatprep.subr.mxu0 0.0
        %825 = vmatpush1.msra.mxu0 0.0
        %826 = vmatprep.subr.mxu0 0.0
        %827 = vmatpush1.msra.mxu0 0.0
        %828 = vmatprep.subr.mxu0 0.0
        %829 = vmatpush1.msra.mxu0 0.0
        %830 = vmatprep.subr.mxu0 0.0
        %831 = vmatpush1.msra.mxu0 0.0
        %832 = vmatprep.subr.mxu0 0.0
        %833 = vmatpush1.msra.mxu0 0.0
        %834 = vmatprep.subr.mxu0 0.0
        %835 = vmatpush1.msra.mxu0 0.0
        %836 = vmatprep.subr.mxu0 0.0
        %837 = vmatpush1.msra.mxu0 0.0
        %838 = vmatprep.subr.mxu0 0.0
        %839 = vmatpush1.msra.mxu0 0.0
        %840 = vmatprep.subr.mxu0 0.0
        %841 = vmatpush1.msra.mxu0 0.0
        %842 = vmatprep.subr.mxu0 0.0
        %843 = vmatpush1.msra.mxu0 0.0
        %844 = vmatprep.subr.mxu0 0.0
        %845 = vmatpush1.msra.mxu0 0.0
        %846 = vmatprep.subr.mxu0 0.0
        %847 = vmatpush1.msra.mxu0 0.0
        %848 = vmatprep.subr.mxu0 0.0
        %849 = vmatpush1.msra.mxu0 0.0
        %850 = vmatprep.subr.mxu0 0.0
        %851 = vmatpush1.msra.mxu0 0.0
        %852 = vmatprep.subr.mxu0 0.0
        %853 = vmatpush1.msra.mxu0 0.0
        %854 = vmatprep.subr.mxu0 0.0
        %855 = vmatpush1.msra.mxu0 0.0
        %856 = vmatprep.subr.mxu0 0.0
        %857 = vmatpush1.msra.mxu0 0.0
        %858 = vmatprep.subr.mxu0 0.0
        %859 = vmatpush1.msra.mxu0 0.0
        %860 = vmatprep.subr.mxu0 0.0
        %861 = vmatpush1.msra.mxu0 0.0
        %862 = vmatprep.subr.mxu0 0.0
        %863 = vmatpush1.msra.mxu0 0.0
        %864 = vmatprep.subr.mxu0 0.0
        %865 = vmatpush1.msra.mxu0 0.0
        %866 = vmatprep.subr.mxu0 0.0
        %867 = vmatpush1.msra.mxu0 0.0
        %868 = vmatprep.subr.mxu0 0.0
        %869 = vmatpush1.msra.mxu0 0.0
        %870 = vmatprep.subr.mxu0 0.0
        %871 = vmatpush1.msra.mxu0 0.0
        %872 = vmatprep.subr.mxu0 0.0
        %873 = vmatpush1.msra.mxu0 0.0
        %874 = vmatprep.subr.mxu0 0.0
        %875 = vmatpush1.msra.mxu0 0.0
        %876 = vmatprep.mubr.f32.mxu0 0.0
        %v877 = vand.u32 %v253, 4294901760
        %878 = vmatmul.mubr.f32.gmra.mrb[0].mxu0 %v877
        %v879 = vpop.f32.mrb[0].mxu0
        %v880 = vadd.f32 %v748, %v879
        %v881 = vpop.f32.mrb[0].mxu0
        %v882 = vadd.f32 %v750, %v881
        %883 = vmatprep.mubr.f32.mxu0 0.0
        %v884 = vand.u32 %v256, 4294901760
        %885 = vmatmul.mubr.f32.gmra.mrb[0].mxu0 %v884
        %v886 = vpop.f32.mrb[0].mxu0
        %v887 = vadd.f32 %v757, %v886
        %v888 = vpop.f32.mrb[0].mxu0
        %v889 = vadd.f32 %v759, %v888
        %890 = vmatprep.mubr.f32.mxu0 0.0
        %v891 = vand.u32 %v259, 4294901760
        %892 = vmatmul.mubr.f32.gmra.mrb[0].mxu0 %v891
        %v893 = vpop.f32.mrb[0].mxu0
        %v894 = vadd.f32 %v766, %v893
        %v895 = vpop.f32.mrb[0].mxu0
        %v896 = vadd.f32 %v768, %v895
        %897 = vmatprep.mubr.f32.mxu0 0.0
        %v898 = vand.u32 %v262, 4294901760
        %899 = vmatmul.mubr.f32.gmra.mrb[0].mxu0 %v898
        %v900 = vpop.f32.mrb[0].mxu0
        %v901 = vadd.f32 %v775, %v900
        %v902 = vpop.f32.mrb[0].mxu0
        %v903 = vadd.f32 %v777, %v902
        %904 = vmatprep.mubr.f32.mxu0 0.0
        %v905 = vand.u32 %v265, 4294901760
        %906 = vmatmul.mubr.f32.gmra.mrb[0].mxu0 %v905
        %v907 = vpop.f32.mrb[0].mxu0
        %v908 = vadd.f32 %v784, %v907
        %v909 = vpop.f32.mrb[0].mxu0
        %v910 = vadd.f32 %v786, %v909
        %911 = vmatprep.mubr.f32.mxu0 0.0
        %v912 = vand.u32 %v268, 4294901760
        %913 = vmatmul.mubr.f32.gmra.mrb[0].mxu0 %v912
        %v914 = vpop.f32.mrb[0].mxu0
        %v915 = vadd.f32 %v793, %v914
        %v916 = vpop.f32.mrb[0].mxu0
        %v917 = vadd.f32 %v795, %v916
        %918 = vmatprep.mubr.f32.mxu0 0.0
        %v919 = vand.u32 %v271, 4294901760
        %920 = vmatmul.mubr.f32.gmra.mrb[0].mxu0 %v919
        %v921 = vpop.f32.mrb[0].mxu0
        %v922 = vadd.f32 %v802, %v921
        %v923 = vpop.f32.mrb[0].mxu0
        %v924 = vadd.f32 %v804, %v923
        %925 = vdwg.mxu0
        %v926 = vand.u32 %v278, 4294901760
        %927 = vmatprep.subr.mxu0 %v926
        %v928 = vand.u32 %v275, 4294901760
        %929 = vmatpush1.msra.mxu0 %v928
        %930 = vmatprep.subr.mxu0 0.0
        %931 = vmatpush1.msra.mxu0 0.0
        %932 = vmatprep.subr.mxu0 0.0
        %933 = vmatpush1.msra.mxu0 0.0
        %934 = vmatprep.subr.mxu0 0.0
        %935 = vmatpush1.msra.mxu0 0.0
        %936 = vmatprep.subr.mxu0 0.0
        %937 = vmatpush1.msra.mxu0 0.0
        %938 = vmatprep.subr.mxu0 0.0
        %939 = vmatpush1.msra.mxu0 0.0
        %940 = vmatprep.subr.mxu0 0.0
        %941 = vmatpush1.msra.mxu0 0.0
        %942 = vmatprep.subr.mxu0 0.0
        %943 = vmatpush1.msra.mxu0 0.0
        %944 = vmatprep.subr.mxu0 0.0
        %945 = vmatpush1.msra.mxu0 0.0
        %946 = vmatprep.subr.mxu0 0.0
        %947 = vmatpush1.msra.mxu0 0.0
        %948 = vmatprep.subr.mxu0 0.0
        %949 = vmatpush1.msra.mxu0 0.0
        %950 = vmatprep.subr.mxu0 0.0
        %951 = vmatpush1.msra.mxu0 0.0
        %952 = vmatprep.subr.mxu0 0.0
        %953 = vmatpush1.msra.mxu0 0.0
        %954 = vmatprep.subr.mxu0 0.0
        %955 = vmatpush1.msra.mxu0 0.0
        %956 = vmatprep.subr.mxu0 0.0
        %957 = vmatpush1.msra.mxu0 0.0
        %958 = vmatprep.subr.mxu0 0.0
        %959 = vmatpush1.msra.mxu0 0.0
        %960 = vmatprep.subr.mxu0 0.0
        %961 = vmatpush1.msra.mxu0 0.0
        %962 = vmatprep.subr.mxu0 0.0
        %963 = vmatpush1.msra.mxu0 0.0
        %964 = vmatprep.subr.mxu0 0.0
        %965 = vmatpush1.msra.mxu0 0.0
        %966 = vmatprep.subr.mxu0 0.0
        %967 = vmatpush1.msra.mxu0 0.0
        %968 = vmatprep.subr.mxu0 0.0
        %969 = vmatpush1.msra.mxu0 0.0
        %970 = vmatprep.subr.mxu0 0.0
        %971 = vmatpush1.msra.mxu0 0.0
        %972 = vmatprep.subr.mxu0 0.0
        %973 = vmatpush1.msra.mxu0 0.0
        %974 = vmatprep.subr.mxu0 0.0
        %975 = vmatpush1.msra.mxu0 0.0
        %976 = vmatprep.subr.mxu0 0.0
        %977 = vmatpush1.msra.mxu0 0.0
        %978 = vmatprep.subr.mxu0 0.0
        %979 = vmatpush1.msra.mxu0 0.0
        %980 = vmatprep.subr.mxu0 0.0
        %981 = vmatpush1.msra.mxu0 0.0
        %982 = vmatprep.subr.mxu0 0.0
        %983 = vmatpush1.msra.mxu0 0.0
        %984 = vmatprep.subr.mxu0 0.0
        %985 = vmatpush1.msra.mxu0 0.0
        %986 = vmatprep.subr.mxu0 0.0
        %987 = vmatpush1.msra.mxu0 0.0
        %988 = vmatprep.subr.mxu0 0.0
        %989 = vmatpush1.msra.mxu0 0.0
        %990 = vmatprep.subr.mxu0 0.0
        %991 = vmatpush1.msra.mxu0 0.0
        %992 = vmatprep.mubr.f32.mxu0 0.0
        %v993 = vand.u32 %v253, 4294901760
        %994 = vmatmul.mubr.f32.gmra.mrb[0].mxu0 %v993
        %v995 = vpop.f32.mrb[0].mxu0
        %v996 = vadd.f32 %v880, %v995
        %v997 = vpop.f32.mrb[0].mxu0
        %v998 = vadd.f32 %v882, %v997
        %999 = vmatprep.mubr.f32.mxu0 0.0
        %v1000 = vand.u32 %v256, 4294901760
        %1001 = vmatmul.mubr.f32.gmra.mrb[0].mxu0 %v1000
        %v1002 = vpop.f32.mrb[0].mxu0
        %v1003 = vadd.f32 %v887, %v1002
        %v1004 = vpop.f32.mrb[0].mxu0
        %v1005 = vadd.f32 %v889, %v1004
        %1006 = vmatprep.mubr.f32.mxu0 0.0
        %v1007 = vand.u32 %v259, 4294901760
        %1008 = vmatmul.mubr.f32.gmra.mrb[0].mxu0 %v1007
        %v1009 = vpop.f32.mrb[0].mxu0
        %v1010 = vadd.f32 %v894, %v1009
        %v1011 = vpop.f32.mrb[0].mxu0
        %v1012 = vadd.f32 %v896, %v1011
        %1013 = vmatprep.mubr.f32.mxu0 0.0
        %v1014 = vand.u32 %v262, 4294901760
        %1015 = vmatmul.mubr.f32.gmra.mrb[0].mxu0 %v1014
        %v1016 = vpop.f32.mrb[0].mxu0
        %v1017 = vadd.f32 %v901, %v1016
        %v1018 = vpop.f32.mrb[0].mxu0
        %v1019 = vadd.f32 %v903, %v1018
        %1020 = vmatprep.mubr.f32.mxu0 0.0
        %v1021 = vand.u32 %v265, 4294901760
        %1022 = vmatmul.mubr.f32.gmra.mrb[0].mxu0 %v1021
        %v1023 = vpop.f32.mrb[0].mxu0
        %v1024 = vadd.f32 %v908, %v1023
        %v1025 = vpop.f32.mrb[0].mxu0
        %v1026 = vadd.f32 %v910, %v1025
        %1027 = vmatprep.mubr.f32.mxu0 0.0
        %v1028 = vand.u32 %v268, 4294901760
        %1029 = vmatmul.mubr.f32.gmra.mrb[0].mxu0 %v1028
        %v1030 = vpop.f32.mrb[0].mxu0
        %v1031 = vadd.f32 %v915, %v1030
        %v1032 = vpop.f32.mrb[0].mxu0
        %v1033 = vadd.f32 %v917, %v1032
        %1034 = vmatprep.mubr.f32.mxu0 0.0
        %v1035 = vand.u32 %v271, 4294901760
        %1036 = vmatmul.mubr.f32.gmra.mrb[0].mxu0 %v1035
        %v1037 = vpop.f32.mrb[0].mxu0
        %v1038 = vadd.f32 %v922, %v1037
        %v1039 = vpop.f32.mrb[0].mxu0
        %v1040 = vadd.f32 %v924, %v1039
        %1041 = vdwg.mxu0
        %1042 = vmatprep.subr.mxu0 0.0
        %v1043 = vand.u32 %v281, 4294901760
        %1044 = vmatpush1.msra.mxu0 %v1043
        %1045 = vmatprep.subr.mxu0 0.0
        %1046 = vmatpush1.msra.mxu0 0.0
        %1047 = vmatprep.subr.mxu0 0.0
        %1048 = vmatpush1.msra.mxu0 0.0
        %1049 = vmatprep.subr.mxu0 0.0
        %1050 = vmatpush1.msra.mxu0 0.0
        %1051 = vmatprep.subr.mxu0 0.0
        %1052 = vmatpush1.msra.mxu0 0.0
        %1053 = vmatprep.subr.mxu0 0.0
        %1054 = vmatpush1.msra.mxu0 0.0
        %1055 = vmatprep.subr.mxu0 0.0
        %1056 = vmatpush1.msra.mxu0 0.0
        %1057 = vmatprep.subr.mxu0 0.0
        %1058 = vmatpush1.msra.mxu0 0.0
        %1059 = vmatprep.subr.mxu0 0.0
        %1060 = vmatpush1.msra.mxu0 0.0
        %1061 = vmatprep.subr.mxu0 0.0
        %1062 = vmatpush1.msra.mxu0 0.0
        %1063 = vmatprep.subr.mxu0 0.0
        %1064 = vmatpush1.msra.mxu0 0.0
        %1065 = vmatprep.subr.mxu0 0.0
        %1066 = vmatpush1.msra.mxu0 0.0
        %1067 = vmatprep.subr.mxu0 0.0
        %1068 = vmatpush1.msra.mxu0 0.0
        %1069 = vmatprep.subr.mxu0 0.0
        %1070 = vmatpush1.msra.mxu0 0.0
        %1071 = vmatprep.subr.mxu0 0.0
        %1072 = vmatpush1.msra.mxu0 0.0
        %1073 = vmatprep.subr.mxu0 0.0
        %1074 = vmatpush1.msra.mxu0 0.0
        %1075 = vmatprep.subr.mxu0 0.0
        %1076 = vmatpush1.msra.mxu0 0.0
        %1077 = vmatprep.subr.mxu0 0.0
        %1078 = vmatpush1.msra.mxu0 0.0
        %1079 = vmatprep.subr.mxu0 0.0
        %1080 = vmatpush1.msra.mxu0 0.0
        %1081 = vmatprep.subr.mxu0 0.0
        %1082 = vmatpush1.msra.mxu0 0.0
        %1083 = vmatprep.subr.mxu0 0.0
        %1084 = vmatpush1.msra.mxu0 0.0
        %1085 = vmatprep.subr.mxu0 0.0
        %1086 = vmatpush1.msra.mxu0 0.0
        %1087 = vmatprep.subr.mxu0 0.0
        %1088 = vmatpush1.msra.mxu0 0.0
        %1089 = vmatprep.subr.mxu0 0.0
        %1090 = vmatpush1.msra.mxu0 0.0
        %1091 = vmatprep.subr.mxu0 0.0
        %1092 = vmatpush1.msra.mxu0 0.0
        %1093 = vmatprep.subr.mxu0 0.0
        %1094 = vmatpush1.msra.mxu0 0.0
        %1095 = vmatprep.subr.mxu0 0.0
        %1096 = vmatpush1.msra.mxu0 0.0
        %1097 = vmatprep.subr.mxu0 0.0
        %1098 = vmatpush1.msra.mxu0 0.0
        %1099 = vmatprep.subr.mxu0 0.0
        %1100 = vmatpush1.msra.mxu0 0.0
        %1101 = vmatprep.subr.mxu0 0.0
        %1102 = vmatpush1.msra.mxu0 0.0
        %1103 = vmatprep.subr.mxu0 0.0
        %1104 = vmatpush1.msra.mxu0 0.0
        %1105 = vmatprep.subr.mxu0 0.0
        %1106 = vmatpush1.msra.mxu0 0.0
        %1107 = vmatprep.mubr.f32.mxu0 0.0
        %v1108 = vand.u32 %v253, 4294901760
        %v1109 = vsub.f32 %v253, %v1108
        %v1110 = vand.u32 %v1109, 4294901760
        %v1111 = vsub.f32 %v1109, %v1110
        %v1112 = vand.u32 %v1111, 4294901760
        %1113 = vmatmul.mubr.f32.gmra.mrb[0].mxu0 %v1112
        %v1114 = vpop.f32.mrb[0].mxu0
        %v1115 = vadd.f32 %v219, %v1114
        %v1116 = vpop.f32.mrb[0].mxu0
        %1117 = vmatprep.mubr.f32.mxu0 0.0
        %v1118 = vand.u32 %v256, 4294901760
        %v1119 = vsub.f32 %v256, %v1118
        %v1120 = vand.u32 %v1119, 4294901760
        %v1121 = vsub.f32 %v1119, %v1120
        %v1122 = vand.u32 %v1121, 4294901760
        %1123 = vmatmul.mubr.f32.gmra.mrb[0].mxu0 %v1122
        %v1124 = vpop.f32.mrb[0].mxu0
        %v1125 = vadd.f32 %v224, %v1124
        %v1126 = vpop.f32.mrb[0].mxu0
        %1127 = vmatprep.mubr.f32.mxu0 0.0
        %v1128 = vand.u32 %v259, 4294901760
        %v1129 = vsub.f32 %v259, %v1128
        %v1130 = vand.u32 %v1129, 4294901760
        %v1131 = vsub.f32 %v1129, %v1130
        %v1132 = vand.u32 %v1131, 4294901760
        %1133 = vmatmul.mubr.f32.gmra.mrb[0].mxu0 %v1132
        %v1134 = vpop.f32.mrb[0].mxu0
        %v1135 = vadd.f32 %v229, %v1134
        %v1136 = vpop.f32.mrb[0].mxu0
        %1137 = vmatprep.mubr.f32.mxu0 0.0
        %v1138 = vand.u32 %v262, 4294901760
        %v1139 = vsub.f32 %v262, %v1138
        %v1140 = vand.u32 %v1139, 4294901760
        %v1141 = vsub.f32 %v1139, %v1140
        %v1142 = vand.u32 %v1141, 4294901760
        %1143 = vmatmul.mubr.f32.gmra.mrb[0].mxu0 %v1142
        %v1144 = vpop.f32.mrb[0].mxu0
        %v1145 = vadd.f32 %v234, %v1144
        %v1146 = vpop.f32.mrb[0].mxu0
        %1147 = vmatprep.mubr.f32.mxu0 0.0
        %v1148 = vand.u32 %v265, 4294901760
        %v1149 = vsub.f32 %v265, %v1148
        %v1150 = vand.u32 %v1149, 4294901760
        %v1151 = vsub.f32 %v1149, %v1150
        %v1152 = vand.u32 %v1151, 4294901760
        %1153 = vmatmul.mubr.f32.gmra.mrb[0].mxu0 %v1152
        %v1154 = vpop.f32.mrb[0].mxu0
        %v1155 = vadd.f32 %v239, %v1154
        %v1156 = vpop.f32.mrb[0].mxu0
        %1157 = vmatprep.mubr.f32.mxu0 0.0
        %v1158 = vand.u32 %v268, 4294901760
        %v1159 = vsub.f32 %v268, %v1158
        %v1160 = vand.u32 %v1159, 4294901760
        %v1161 = vsub.f32 %v1159, %v1160
        %v1162 = vand.u32 %v1161, 4294901760
        %1163 = vmatmul.mubr.f32.gmra.mrb[0].mxu0 %v1162
        %v1164 = vpop.f32.mrb[0].mxu0
        %v1165 = vadd.f32 %v244, %v1164
        %v1166 = vpop.f32.mrb[0].mxu0
        %1167 = vmatprep.mubr.f32.mxu0 0.0
        %v1168 = vand.u32 %v271, 4294901760
        %v1169 = vsub.f32 %v271, %v1168
        %v1170 = vand.u32 %v1169, 4294901760
        %v1171 = vsub.f32 %v1169, %v1170
        %v1172 = vand.u32 %v1171, 4294901760
        %1173 = vmatmul.mubr.f32.gmra.mrb[0].mxu0 %v1172
        %v1174 = vpop.f32.mrb[0].mxu0
        %v1175 = vadd.f32 %v249, %v1174
        %v1176 = vpop.f32.mrb[0].mxu0
        %1177 = vdwg.mxu0
        %1178 = vmatprep.subr.mxu0 0.0
        %v1179 = vand.u32 %v281, 4294901760
        %v1180 = vsub.f32 %v281, %v1179
        %v1181 = vand.u32 %v1180, 4294901760
        %v1182 = vsub.f32 %v1180, %v1181
        %v1183 = vand.u32 %v1182, 4294901760
        %1184 = vmatpush1.msra.mxu0 %v1183
        %1185 = vmatprep.subr.mxu0 0.0
        %1186 = vmatpush1.msra.mxu0 0.0
        %1187 = vmatprep.subr.mxu0 0.0
        %1188 = vmatpush1.msra.mxu0 0.0
        %1189 = vmatprep.subr.mxu0 0.0
        %1190 = vmatpush1.msra.mxu0 0.0
        %1191 = vmatprep.subr.mxu0 0.0
        %1192 = vmatpush1.msra.mxu0 0.0
        %1193 = vmatprep.subr.mxu0 0.0
        %1194 = vmatpush1.msra.mxu0 0.0
        %1195 = vmatprep.subr.mxu0 0.0
        %1196 = vmatpush1.msra.mxu0 0.0
        %1197 = vmatprep.subr.mxu0 0.0
        %1198 = vmatpush1.msra.mxu0 0.0
        %1199 = vmatprep.subr.mxu0 0.0
        %1200 = vmatpush1.msra.mxu0 0.0
        %1201 = vmatprep.subr.mxu0 0.0
        %1202 = vmatpush1.msra.mxu0 0.0
        %1203 = vmatprep.subr.mxu0 0.0
        %1204 = vmatpush1.msra.mxu0 0.0
        %1205 = vmatprep.subr.mxu0 0.0
        %1206 = vmatpush1.msra.mxu0 0.0
        %1207 = vmatprep.subr.mxu0 0.0
        %1208 = vmatpush1.msra.mxu0 0.0
        %1209 = vmatprep.subr.mxu0 0.0
        %1210 = vmatpush1.msra.mxu0 0.0
        %1211 = vmatprep.subr.mxu0 0.0
        %1212 = vmatpush1.msra.mxu0 0.0
        %1213 = vmatprep.subr.mxu0 0.0
        %1214 = vmatpush1.msra.mxu0 0.0
        %1215 = vmatprep.subr.mxu0 0.0
        %1216 = vmatpush1.msra.mxu0 0.0
        %1217 = vmatprep.subr.mxu0 0.0
        %1218 = vmatpush1.msra.mxu0 0.0
        %1219 = vmatprep.subr.mxu0 0.0
        %1220 = vmatpush1.msra.mxu0 0.0
        %1221 = vmatprep.subr.mxu0 0.0
        %1222 = vmatpush1.msra.mxu0 0.0
        %1223 = vmatprep.subr.mxu0 0.0
        %1224 = vmatpush1.msra.mxu0 0.0
        %1225 = vmatprep.subr.mxu0 0.0
        %1226 = vmatpush1.msra.mxu0 0.0
        %1227 = vmatprep.subr.mxu0 0.0
        %1228 = vmatpush1.msra.mxu0 0.0
        %1229 = vmatprep.subr.mxu0 0.0
        %1230 = vmatpush1.msra.mxu0 0.0
        %1231 = vmatprep.subr.mxu0 0.0
        %1232 = vmatpush1.msra.mxu0 0.0
        %1233 = vmatprep.subr.mxu0 0.0
        %1234 = vmatpush1.msra.mxu0 0.0
        %1235 = vmatprep.subr.mxu0 0.0
        %1236 = vmatpush1.msra.mxu0 0.0
        %1237 = vmatprep.subr.mxu0 0.0
        %1238 = vmatpush1.msra.mxu0 0.0
        %1239 = vmatprep.subr.mxu0 0.0
        %1240 = vmatpush1.msra.mxu0 0.0
        %1241 = vmatprep.subr.mxu0 0.0
        %1242 = vmatpush1.msra.mxu0 0.0
        %1243 = vmatprep.subr.mxu0 0.0
        %1244 = vmatpush1.msra.mxu0 0.0
        %1245 = vmatprep.subr.mxu0 0.0
        %1246 = vmatpush1.msra.mxu0 0.0
        %1247 = vmatprep.mubr.f32.mxu0 0.0
        %v1248 = vand.u32 %v253, 4294901760
        %1249 = vmatmul.mubr.f32.gmra.mrb[0].mxu0 %v1248
        %v1250 = vpop.f32.mrb[0].mxu0
        %v1251 = vadd.f32 %v1115, %v1250
        %v1252 = vpop.f32.mrb[0].mxu0
        %1253 = vmatprep.mubr.f32.mxu0 0.0
        %v1254 = vand.u32 %v256, 4294901760
        %1255 = vmatmul.mubr.f32.gmra.mrb[0].mxu0 %v1254
        %v1256 = vpop.f32.mrb[0].mxu0
        %v1257 = vadd.f32 %v1125, %v1256
        %v1258 = vpop.f32.mrb[0].mxu0
        %1259 = vmatprep.mubr.f32.mxu0 0.0
        %v1260 = vand.u32 %v259, 4294901760
        %1261 = vmatmul.mubr.f32.gmra.mrb[0].mxu0 %v1260
        %v1262 = vpop.f32.mrb[0].mxu0
        %v1263 = vadd.f32 %v1135, %v1262
        %v1264 = vpop.f32.mrb[0].mxu0
        %1265 = vmatprep.mubr.f32.mxu0 0.0
        %v1266 = vand.u32 %v262, 4294901760
        %1267 = vmatmul.mubr.f32.gmra.mrb[0].mxu0 %v1266
        %v1268 = vpop.f32.mrb[0].mxu0
        %v1269 = vadd.f32 %v1145, %v1268
        %v1270 = vpop.f32.mrb[0].mxu0
        %1271 = vmatprep.mubr.f32.mxu0 0.0
        %v1272 = vand.u32 %v265, 4294901760
        %1273 = vmatmul.mubr.f32.gmra.mrb[0].mxu0 %v1272
        %v1274 = vpop.f32.mrb[0].mxu0
        %v1275 = vadd.f32 %v1155, %v1274
        %v1276 = vpop.f32.mrb[0].mxu0
        %1277 = vmatprep.mubr.f32.mxu0 0.0
        %v1278 = vand.u32 %v268, 4294901760
        %1279 = vmatmul.mubr.f32.gmra.mrb[0].mxu0 %v1278
        %v1280 = vpop.f32.mrb[0].mxu0
        %v1281 = vadd.f32 %v1165, %v1280
        %v1282 = vpop.f32.mrb[0].mxu0
        %1283 = vmatprep.mubr.f32.mxu0 0.0
        %v1284 = vand.u32 %v271, 4294901760
        %1285 = vmatmul.mubr.f32.gmra.mrb[0].mxu0 %v1284
        %v1286 = vpop.f32.mrb[0].mxu0
        %v1287 = vadd.f32 %v1175, %v1286
        %v1288 = vpop.f32.mrb[0].mxu0
        %1289 = vdwg.mxu0
        %1290 = vmatprep.subr.mxu0 0.0
        %v1291 = vand.u32 %v281, 4294901760
        %v1292 = vsub.f32 %v281, %v1291
        %1293 = vmatpush1.msra.mxu0 %v1292
        %1294 = vmatprep.subr.mxu0 0.0
        %1295 = vmatpush1.msra.mxu0 0.0
        %1296 = vmatprep.subr.mxu0 0.0
        %1297 = vmatpush1.msra.mxu0 0.0
        %1298 = vmatprep.subr.mxu0 0.0
        %1299 = vmatpush1.msra.mxu0 0.0
        %1300 = vmatprep.subr.mxu0 0.0
        %1301 = vmatpush1.msra.mxu0 0.0
        %1302 = vmatprep.subr.mxu0 0.0
        %1303 = vmatpush1.msra.mxu0 0.0
        %1304 = vmatprep.subr.mxu0 0.0
        %1305 = vmatpush1.msra.mxu0 0.0
        %1306 = vmatprep.subr.mxu0 0.0
        %1307 = vmatpush1.msra.mxu0 0.0
        %1308 = vmatprep.subr.mxu0 0.0
        %1309 = vmatpush1.msra.mxu0 0.0
        %1310 = vmatprep.subr.mxu0 0.0
        %1311 = vmatpush1.msra.mxu0 0.0
        %1312 = vmatprep.subr.mxu0 0.0
        %1313 = vmatpush1.msra.mxu0 0.0
        %1314 = vmatprep.subr.mxu0 0.0
        %1315 = vmatpush1.msra.mxu0 0.0
        %1316 = vmatprep.subr.mxu0 0.0
        %1317 = vmatpush1.msra.mxu0 0.0
        %1318 = vmatprep.subr.mxu0 0.0
        %1319 = vmatpush1.msra.mxu0 0.0
        %1320 = vmatprep.subr.mxu0 0.0
        %1321 = vmatpush1.msra.mxu0 0.0
        %1322 = vmatprep.subr.mxu0 0.0
        %1323 = vmatpush1.msra.mxu0 0.0
        %1324 = vmatprep.subr.mxu0 0.0
        %1325 = vmatpush1.msra.mxu0 0.0
        %1326 = vmatprep.subr.mxu0 0.0
        %1327 = vmatpush1.msra.mxu0 0.0
        %1328 = vmatprep.subr.mxu0 0.0
        %1329 = vmatpush1.msra.mxu0 0.0
        %1330 = vmatprep.subr.mxu0 0.0
        %1331 = vmatpush1.msra.mxu0 0.0
        %1332 = vmatprep.subr.mxu0 0.0
        %1333 = vmatpush1.msra.mxu0 0.0
        %1334 = vmatprep.subr.mxu0 0.0
        %1335 = vmatpush1.msra.mxu0 0.0
        %1336 = vmatprep.subr.mxu0 0.0
        %1337 = vmatpush1.msra.mxu0 0.0
        %1338 = vmatprep.subr.mxu0 0.0
        %1339 = vmatpush1.msra.mxu0 0.0
        %1340 = vmatprep.subr.mxu0 0.0
        %1341 = vmatpush1.msra.mxu0 0.0
        %1342 = vmatprep.subr.mxu0 0.0
        %1343 = vmatpush1.msra.mxu0 0.0
        %1344 = vmatprep.subr.mxu0 0.0
        %1345 = vmatpush1.msra.mxu0 0.0
        %1346 = vmatprep.subr.mxu0 0.0
        %1347 = vmatpush1.msra.mxu0 0.0
        %1348 = vmatprep.subr.mxu0 0.0
        %1349 = vmatpush1.msra.mxu0 0.0
        %1350 = vmatprep.subr.mxu0 0.0
        %1351 = vmatpush1.msra.mxu0 0.0
        %1352 = vmatprep.subr.mxu0 0.0
        %1353 = vmatpush1.msra.mxu0 0.0
        %1354 = vmatprep.subr.mxu0 0.0
        %1355 = vmatpush1.msra.mxu0 0.0
        %1356 = vmatprep.mubr.f32.mxu0 0.0
        %v1357 = vand.u32 %v253, 4294901760
        %v1358 = vsub.f32 %v253, %v1357
        %1359 = vmatmul.mubr.f32.gmra.mrb[0].mxu0 %v1358
        %v1360 = vpop.f32.mrb[0].mxu0
        %v1361 = vadd.f32 %v1251, %v1360
        %v1362 = vpop.f32.mrb[0].mxu0
        %1363 = vmatprep.mubr.f32.mxu0 0.0
        %v1364 = vand.u32 %v256, 4294901760
        %v1365 = vsub.f32 %v256, %v1364
        %1366 = vmatmul.mubr.f32.gmra.mrb[0].mxu0 %v1365
        %v1367 = vpop.f32.mrb[0].mxu0
        %v1368 = vadd.f32 %v1257, %v1367
        %v1369 = vpop.f32.mrb[0].mxu0
        %1370 = vmatprep.mubr.f32.mxu0 0.0
        %v1371 = vand.u32 %v259, 4294901760
        %v1372 = vsub.f32 %v259, %v1371
        %1373 = vmatmul.mubr.f32.gmra.mrb[0].mxu0 %v1372
        %v1374 = vpop.f32.mrb[0].mxu0
        %v1375 = vadd.f32 %v1263, %v1374
        %v1376 = vpop.f32.mrb[0].mxu0
        %1377 = vmatprep.mubr.f32.mxu0 0.0
        %v1378 = vand.u32 %v262, 4294901760
        %v1379 = vsub.f32 %v262, %v1378
        %1380 = vmatmul.mubr.f32.gmra.mrb[0].mxu0 %v1379
        %v1381 = vpop.f32.mrb[0].mxu0
        %v1382 = vadd.f32 %v1269, %v1381
        %v1383 = vpop.f32.mrb[0].mxu0
        %1384 = vmatprep.mubr.f32.mxu0 0.0
        %v1385 = vand.u32 %v265, 4294901760
        %v1386 = vsub.f32 %v265, %v1385
        %1387 = vmatmul.mubr.f32.gmra.mrb[0].mxu0 %v1386
        %v1388 = vpop.f32.mrb[0].mxu0
        %v1389 = vadd.f32 %v1275, %v1388
        %v1390 = vpop.f32.mrb[0].mxu0
        %1391 = vmatprep.mubr.f32.mxu0 0.0
        %v1392 = vand.u32 %v268, 4294901760
        %v1393 = vsub.f32 %v268, %v1392
        %1394 = vmatmul.mubr.f32.gmra.mrb[0].mxu0 %v1393
        %v1395 = vpop.f32.mrb[0].mxu0
        %v1396 = vadd.f32 %v1281, %v1395
        %v1397 = vpop.f32.mrb[0].mxu0
        %1398 = vmatprep.mubr.f32.mxu0 0.0
        %v1399 = vand.u32 %v271, 4294901760
        %v1400 = vsub.f32 %v271, %v1399
        %1401 = vmatmul.mubr.f32.gmra.mrb[0].mxu0 %v1400
        %v1402 = vpop.f32.mrb[0].mxu0
        %v1403 = vadd.f32 %v1287, %v1402
        %v1404 = vpop.f32.mrb[0].mxu0
        %1405 = vdwg.mxu0
        %1406 = vmatprep.subr.mxu0 0.0
        %v1407 = vand.u32 %v281, 4294901760
        %1408 = vmatpush1.msra.mxu0 %v1407
        %1409 = vmatprep.subr.mxu0 0.0
        %1410 = vmatpush1.msra.mxu0 0.0
        %1411 = vmatprep.subr.mxu0 0.0
        %1412 = vmatpush1.msra.mxu0 0.0
        %1413 = vmatprep.subr.mxu0 0.0
        %1414 = vmatpush1.msra.mxu0 0.0
        %1415 = vmatprep.subr.mxu0 0.0
        %1416 = vmatpush1.msra.mxu0 0.0
        %1417 = vmatprep.subr.mxu0 0.0
        %1418 = vmatpush1.msra.mxu0 0.0
        %1419 = vmatprep.subr.mxu0 0.0
        %1420 = vmatpush1.msra.mxu0 0.0
        %1421 = vmatprep.subr.mxu0 0.0
        %1422 = vmatpush1.msra.mxu0 0.0
        %1423 = vmatprep.subr.mxu0 0.0
        %1424 = vmatpush1.msra.mxu0 0.0
        %1425 = vmatprep.subr.mxu0 0.0
        %1426 = vmatpush1.msra.mxu0 0.0
        %1427 = vmatprep.subr.mxu0 0.0
        %1428 = vmatpush1.msra.mxu0 0.0
        %1429 = vmatprep.subr.mxu0 0.0
        %1430 = vmatpush1.msra.mxu0 0.0
        %1431 = vmatprep.subr.mxu0 0.0
        %1432 = vmatpush1.msra.mxu0 0.0
        %1433 = vmatprep.subr.mxu0 0.0
        %1434 = vmatpush1.msra.mxu0 0.0
        %1435 = vmatprep.subr.mxu0 0.0
        %1436 = vmatpush1.msra.mxu0 0.0
        %1437 = vmatprep.subr.mxu0 0.0
        %1438 = vmatpush1.msra.mxu0 0.0
        %1439 = vmatprep.subr.mxu0 0.0
        %1440 = vmatpush1.msra.mxu0 0.0
        %1441 = vmatprep.subr.mxu0 0.0
        %1442 = vmatpush1.msra.mxu0 0.0
        %1443 = vmatprep.subr.mxu0 0.0
        %1444 = vmatpush1.msra.mxu0 0.0
        %1445 = vmatprep.subr.mxu0 0.0
        %1446 = vmatpush1.msra.mxu0 0.0
        %1447 = vmatprep.subr.mxu0 0.0
        %1448 = vmatpush1.msra.mxu0 0.0
        %1449 = vmatprep.subr.mxu0 0.0
        %1450 = vmatpush1.msra.mxu0 0.0
        %1451 = vmatprep.subr.mxu0 0.0
        %1452 = vmatpush1.msra.mxu0 0.0
        %1453 = vmatprep.subr.mxu0 0.0
        %1454 = vmatpush1.msra.mxu0 0.0
        %1455 = vmatprep.subr.mxu0 0.0
        %1456 = vmatpush1.msra.mxu0 0.0
        %1457 = vmatprep.subr.mxu0 0.0
        %1458 = vmatpush1.msra.mxu0 0.0
        %1459 = vmatprep.subr.mxu0 0.0
        %1460 = vmatpush1.msra.mxu0 0.0
        %1461 = vmatprep.subr.mxu0 0.0
        %1462 = vmatpush1.msra.mxu0 0.0
        %1463 = vmatprep.subr.mxu0 0.0
        %1464 = vmatpush1.msra.mxu0 0.0
        %1465 = vmatprep.subr.mxu0 0.0
        %1466 = vmatpush1.msra.mxu0 0.0
        %1467 = vmatprep.subr.mxu0 0.0
        %1468 = vmatpush1.msra.mxu0 0.0
        %1469 = vmatprep.subr.mxu0 0.0
        %1470 = vmatpush1.msra.mxu0 0.0
        %1471 = vmatprep.mubr.f32.mxu0 0.0
        %v1472 = vand.u32 %v253, 4294901760
        %v1473 = vsub.f32 %v253, %v1472
        %v1474 = vand.u32 %v1473, 4294901760
        %1475 = vmatmul.mubr.f32.gmra.mrb[0].mxu0 %v1474
        %v1476 = vpop.f32.mrb[0].mxu0
        %v1477 = vadd.f32 %v1361, %v1476
        %v1478 = vpop.f32.mrb[0].mxu0
        %1479 = vmatprep.mubr.f32.mxu0 0.0
        %v1480 = vand.u32 %v256, 4294901760
        %v1481 = vsub.f32 %v256, %v1480
        %v1482 = vand.u32 %v1481, 4294901760
        %1483 = vmatmul.mubr.f32.gmra.mrb[0].mxu0 %v1482
        %v1484 = vpop.f32.mrb[0].mxu0
        %v1485 = vadd.f32 %v1368, %v1484
        %v1486 = vpop.f32.mrb[0].mxu0
        %1487 = vmatprep.mubr.f32.mxu0 0.0
        %v1488 = vand.u32 %v259, 4294901760
        %v1489 = vsub.f32 %v259, %v1488
        %v1490 = vand.u32 %v1489, 4294901760
        %1491 = vmatmul.mubr.f32.gmra.mrb[0].mxu0 %v1490
        %v1492 = vpop.f32.mrb[0].mxu0
        %v1493 = vadd.f32 %v1375, %v1492
        %v1494 = vpop.f32.mrb[0].mxu0
        %1495 = vmatprep.mubr.f32.mxu0 0.0
        %v1496 = vand.u32 %v262, 4294901760
        %v1497 = vsub.f32 %v262, %v1496
        %v1498 = vand.u32 %v1497, 4294901760
        %1499 = vmatmul.mubr.f32.gmra.mrb[0].mxu0 %v1498
        %v1500 = vpop.f32.mrb[0].mxu0
        %v1501 = vadd.f32 %v1382, %v1500
        %v1502 = vpop.f32.mrb[0].mxu0
        %1503 = vmatprep.mubr.f32.mxu0 0.0
        %v1504 = vand.u32 %v265, 4294901760
        %v1505 = vsub.f32 %v265, %v1504
        %v1506 = vand.u32 %v1505, 4294901760
        %1507 = vmatmul.mubr.f32.gmra.mrb[0].mxu0 %v1506
        %v1508 = vpop.f32.mrb[0].mxu0
        %v1509 = vadd.f32 %v1389, %v1508
        %v1510 = vpop.f32.mrb[0].mxu0
        %1511 = vmatprep.mubr.f32.mxu0 0.0
        %v1512 = vand.u32 %v268, 4294901760
        %v1513 = vsub.f32 %v268, %v1512
        %v1514 = vand.u32 %v1513, 4294901760
        %1515 = vmatmul.mubr.f32.gmra.mrb[0].mxu0 %v1514
        %v1516 = vpop.f32.mrb[0].mxu0
        %v1517 = vadd.f32 %v1396, %v1516
        %v1518 = vpop.f32.mrb[0].mxu0
        %1519 = vmatprep.mubr.f32.mxu0 0.0
        %v1520 = vand.u32 %v271, 4294901760
        %v1521 = vsub.f32 %v271, %v1520
        %v1522 = vand.u32 %v1521, 4294901760
        %1523 = vmatmul.mubr.f32.gmra.mrb[0].mxu0 %v1522
        %v1524 = vpop.f32.mrb[0].mxu0
        %v1525 = vadd.f32 %v1403, %v1524
        %v1526 = vpop.f32.mrb[0].mxu0
        %1527 = vdwg.mxu0
        %1528 = vmatprep.subr.mxu0 0.0
        %v1529 = vand.u32 %v281, 4294901760
        %v1530 = vsub.f32 %v281, %v1529
        %v1531 = vand.u32 %v1530, 4294901760
        %1532 = vmatpush1.msra.mxu0 %v1531
        %1533 = vmatprep.subr.mxu0 0.0
        %1534 = vmatpush1.msra.mxu0 0.0
        %1535 = vmatprep.subr.mxu0 0.0
        %1536 = vmatpush1.msra.mxu0 0.0
        %1537 = vmatprep.subr.mxu0 0.0
        %1538 = vmatpush1.msra.mxu0 0.0
        %1539 = vmatprep.subr.mxu0 0.0
        %1540 = vmatpush1.msra.mxu0 0.0
        %1541 = vmatprep.subr.mxu0 0.0
        %1542 = vmatpush1.msra.mxu0 0.0
        %1543 = vmatprep.subr.mxu0 0.0
        %1544 = vmatpush1.msra.mxu0 0.0
        %1545 = vmatprep.subr.mxu0 0.0
        %1546 = vmatpush1.msra.mxu0 0.0
        %1547 = vmatprep.subr.mxu0 0.0
        %1548 = vmatpush1.msra.mxu0 0.0
        %1549 = vmatprep.subr.mxu0 0.0
        %1550 = vmatpush1.msra.mxu0 0.0
        %1551 = vmatprep.subr.mxu0 0.0
        %1552 = vmatpush1.msra.mxu0 0.0
        %1553 = vmatprep.subr.mxu0 0.0
        %1554 = vmatpush1.msra.mxu0 0.0
        %1555 = vmatprep.subr.mxu0 0.0
        %1556 = vmatpush1.msra.mxu0 0.0
        %1557 = vmatprep.subr.mxu0 0.0
        %1558 = vmatpush1.msra.mxu0 0.0
        %1559 = vmatprep.subr.mxu0 0.0
        %1560 = vmatpush1.msra.mxu0 0.0
        %1561 = vmatprep.subr.mxu0 0.0
        %1562 = vmatpush1.msra.mxu0 0.0
        %1563 = vmatprep.subr.mxu0 0.0
        %1564 = vmatpush1.msra.mxu0 0.0
        %1565 = vmatprep.subr.mxu0 0.0
        %1566 = vmatpush1.msra.mxu0 0.0
        %1567 = vmatprep.subr.mxu0 0.0
        %1568 = vmatpush1.msra.mxu0 0.0
        %1569 = vmatprep.subr.mxu0 0.0
        %1570 = vmatpush1.msra.mxu0 0.0
        %1571 = vmatprep.subr.mxu0 0.0
        %1572 = vmatpush1.msra.mxu0 0.0
        %1573 = vmatprep.subr.mxu0 0.0
        %1574 = vmatpush1.msra.mxu0 0.0
        %1575 = vmatprep.subr.mxu0 0.0
        %1576 = vmatpush1.msra.mxu0 0.0
        %1577 = vmatprep.subr.mxu0 0.0
        %1578 = vmatpush1.msra.mxu0 0.0
        %1579 = vmatprep.subr.mxu0 0.0
        %1580 = vmatpush1.msra.mxu0 0.0
        %1581 = vmatprep.subr.mxu0 0.0
        %1582 = vmatpush1.msra.mxu0 0.0
        %1583 = vmatprep.subr.mxu0 0.0
        %1584 = vmatpush1.msra.mxu0 0.0
        %1585 = vmatprep.subr.mxu0 0.0
        %1586 = vmatpush1.msra.mxu0 0.0
        %1587 = vmatprep.subr.mxu0 0.0
        %1588 = vmatpush1.msra.mxu0 0.0
        %1589 = vmatprep.subr.mxu0 0.0
        %1590 = vmatpush1.msra.mxu0 0.0
        %1591 = vmatprep.subr.mxu0 0.0
        %1592 = vmatpush1.msra.mxu0 0.0
        %1593 = vmatprep.subr.mxu0 0.0
        %1594 = vmatpush1.msra.mxu0 0.0
        %1595 = vmatprep.mubr.f32.mxu0 0.0
        %v1596 = vand.u32 %v253, 4294901760
        %1597 = vmatmul.mubr.f32.gmra.mrb[0].mxu0 %v1596
        %v1598 = vpop.f32.mrb[0].mxu0
        %v1599 = vadd.f32 %v1477, %v1598
        %v1600 = vpop.f32.mrb[0].mxu0
        %1601 = vmatprep.mubr.f32.mxu0 0.0
        %v1602 = vand.u32 %v256, 4294901760
        %1603 = vmatmul.mubr.f32.gmra.mrb[0].mxu0 %v1602
        %v1604 = vpop.f32.mrb[0].mxu0
        %v1605 = vadd.f32 %v1485, %v1604
        %v1606 = vpop.f32.mrb[0].mxu0
        %1607 = vmatprep.mubr.f32.mxu0 0.0
        %v1608 = vand.u32 %v259, 4294901760
        %1609 = vmatmul.mubr.f32.gmra.mrb[0].mxu0 %v1608
        %v1610 = vpop.f32.mrb[0].mxu0
        %v1611 = vadd.f32 %v1493, %v1610
        %v1612 = vpop.f32.mrb[0].mxu0
        %1613 = vmatprep.mubr.f32.mxu0 0.0
        %v1614 = vand.u32 %v262, 4294901760
        %1615 = vmatmul.mubr.f32.gmra.mrb[0].mxu0 %v1614
        %v1616 = vpop.f32.mrb[0].mxu0
        %v1617 = vadd.f32 %v1501, %v1616
        %v1618 = vpop.f32.mrb[0].mxu0
        %1619 = vmatprep.mubr.f32.mxu0 0.0
        %v1620 = vand.u32 %v265, 4294901760
        %1621 = vmatmul.mubr.f32.gmra.mrb[0].mxu0 %v1620
        %v1622 = vpop.f32.mrb[0].mxu0
        %v1623 = vadd.f32 %v1509, %v1622
        %v1624 = vpop.f32.mrb[0].mxu0
        %1625 = vmatprep.mubr.f32.mxu0 0.0
        %v1626 = vand.u32 %v268, 4294901760
        %1627 = vmatmul.mubr.f32.gmra.mrb[0].mxu0 %v1626
        %v1628 = vpop.f32.mrb[0].mxu0
        %v1629 = vadd.f32 %v1517, %v1628
        %v1630 = vpop.f32.mrb[0].mxu0
        %1631 = vmatprep.mubr.f32.mxu0 0.0
        %v1632 = vand.u32 %v271, 4294901760
        %1633 = vmatmul.mubr.f32.gmra.mrb[0].mxu0 %v1632
        %v1634 = vpop.f32.mrb[0].mxu0
        %v1635 = vadd.f32 %v1525, %v1634
        %v1636 = vpop.f32.mrb[0].mxu0
        %1637 = vdwg.mxu0
        %1638 = vmatprep.subr.mxu0 0.0
        %v1639 = vand.u32 %v281, 4294901760
        %1640 = vmatpush1.msra.mxu0 %v1639
        %1641 = vmatprep.subr.mxu0 0.0
        %1642 = vmatpush1.msra.mxu0 0.0
        %1643 = vmatprep.subr.mxu0 0.0
        %1644 = vmatpush1.msra.mxu0 0.0
        %1645 = vmatprep.subr.mxu0 0.0
        %1646 = vmatpush1.msra.mxu0 0.0
        %1647 = vmatprep.subr.mxu0 0.0
        %1648 = vmatpush1.msra.mxu0 0.0
        %1649 = vmatprep.subr.mxu0 0.0
        %1650 = vmatpush1.msra.mxu0 0.0
        %1651 = vmatprep.subr.mxu0 0.0
        %1652 = vmatpush1.msra.mxu0 0.0
        %1653 = vmatprep.subr.mxu0 0.0
        %1654 = vmatpush1.msra.mxu0 0.0
        %1655 = vmatprep.subr.mxu0 0.0
        %1656 = vmatpush1.msra.mxu0 0.0
        %1657 = vmatprep.subr.mxu0 0.0
        %1658 = vmatpush1.msra.mxu0 0.0
        %1659 = vmatprep.subr.mxu0 0.0
        %1660 = vmatpush1.msra.mxu0 0.0
        %1661 = vmatprep.subr.mxu0 0.0
        %1662 = vmatpush1.msra.mxu0 0.0
        %1663 = vmatprep.subr.mxu0 0.0
        %1664 = vmatpush1.msra.mxu0 0.0
        %1665 = vmatprep.subr.mxu0 0.0
        %1666 = vmatpush1.msra.mxu0 0.0
        %1667 = vmatprep.subr.mxu0 0.0
        %1668 = vmatpush1.msra.mxu0 0.0
        %1669 = vmatprep.subr.mxu0 0.0
        %1670 = vmatpush1.msra.mxu0 0.0
        %1671 = vmatprep.subr.mxu0 0.0
        %1672 = vmatpush1.msra.mxu0 0.0
        %1673 = vmatprep.subr.mxu0 0.0
        %1674 = vmatpush1.msra.mxu0 0.0
        %1675 = vmatprep.subr.mxu0 0.0
        %1676 = vmatpush1.msra.mxu0 0.0
        %1677 = vmatprep.subr.mxu0 0.0
        %1678 = vmatpush1.msra.mxu0 0.0
        %1679 = vmatprep.subr.mxu0 0.0
        %1680 = vmatpush1.msra.mxu0 0.0
        %1681 = vmatprep.subr.mxu0 0.0
        %1682 = vmatpush1.msra.mxu0 0.0
        %1683 = vmatprep.subr.mxu0 0.0
        %1684 = vmatpush1.msra.mxu0 0.0
        %1685 = vmatprep.subr.mxu0 0.0
        %1686 = vmatpush1.msra.mxu0 0.0
        %1687 = vmatprep.subr.mxu0 0.0
        %1688 = vmatpush1.msra.mxu0 0.0
        %1689 = vmatprep.subr.mxu0 0.0
        %1690 = vmatpush1.msra.mxu0 0.0
        %1691 = vmatprep.subr.mxu0 0.0
        %1692 = vmatpush1.msra.mxu0 0.0
        %1693 = vmatprep.subr.mxu0 0.0
        %1694 = vmatpush1.msra.mxu0 0.0
        %1695 = vmatprep.subr.mxu0 0.0
        %1696 = vmatpush1.msra.mxu0 0.0
        %1697 = vmatprep.subr.mxu0 0.0
        %1698 = vmatpush1.msra.mxu0 0.0
        %1699 = vmatprep.subr.mxu0 0.0
        %1700 = vmatpush1.msra.mxu0 0.0
        %1701 = vmatprep.subr.mxu0 0.0
        %1702 = vmatpush1.msra.mxu0 0.0
        %1703 = vmatprep.mubr.f32.mxu0 0.0
        %v1704 = vand.u32 %v253, 4294901760
        %1705 = vmatmul.mubr.f32.gmra.mrb[0].mxu0 %v1704
        %v1706 = vpop.f32.mrb[0].mxu0
        %v1707 = vadd.f32 %v1599, %v1706
        %v1708 = vpop.f32.mrb[0].mxu0
        %1709 = vmatprep.mubr.f32.mxu0 0.0
        %v1710 = vand.u32 %v256, 4294901760
        %1711 = vmatmul.mubr.f32.gmra.mrb[0].mxu0 %v1710
        %v1712 = vpop.f32.mrb[0].mxu0
        %v1713 = vadd.f32 %v1605, %v1712
        %v1714 = vpop.f32.mrb[0].mxu0
        %1715 = vmatprep.mubr.f32.mxu0 0.0
        %v1716 = vand.u32 %v259, 4294901760
        %1717 = vmatmul.mubr.f32.gmra.mrb[0].mxu0 %v1716
        %v1718 = vpop.f32.mrb[0].mxu0
        %v1719 = vadd.f32 %v1611, %v1718
        %v1720 = vpop.f32.mrb[0].mxu0
        %1721 = vmatprep.mubr.f32.mxu0 0.0
        %v1722 = vand.u32 %v262, 4294901760
        %1723 = vmatmul.mubr.f32.gmra.mrb[0].mxu0 %v1722
        %v1724 = vpop.f32.mrb[0].mxu0
        %v1725 = vadd.f32 %v1617, %v1724
        %v1726 = vpop.f32.mrb[0].mxu0
        %1727 = vmatprep.mubr.f32.mxu0 0.0
        %v1728 = vand.u32 %v265, 4294901760
        %1729 = vmatmul.mubr.f32.gmra.mrb[0].mxu0 %v1728
        %v1730 = vpop.f32.mrb[0].mxu0
        %v1731 = vadd.f32 %v1623, %v1730
        %v1732 = vpop.f32.mrb[0].mxu0
        %1733 = vmatprep.mubr.f32.mxu0 0.0
        %v1734 = vand.u32 %v268, 4294901760
        %1735 = vmatmul.mubr.f32.gmra.mrb[0].mxu0 %v1734
        %v1736 = vpop.f32.mrb[0].mxu0
        %v1737 = vadd.f32 %v1629, %v1736
        %v1738 = vpop.f32.mrb[0].mxu0
        %1739 = vmatprep.mubr.f32.mxu0 0.0
        %v1740 = vand.u32 %v271, 4294901760
        %1741 = vmatmul.mubr.f32.gmra.mrb[0].mxu0 %v1740
        %v1742 = vpop.f32.mrb[0].mxu0
        %v1743 = vadd.f32 %v1635, %v1742
        %v1744 = vpop.f32.mrb[0].mxu0
        %1745 = vdwg.mxu0
        %v1746 = vmul.f32 %v1003, %v1024
        %v1747 = vmul.f32 %v1005, %v1026
        %v1748 = vmul.f32 %v1713, %v1731
        %v1749 = vmul.f32 %v1010, %v1031
        %v1750 = vmul.f32 %v1012, %v1033
        %v1751 = vmul.f32 %v1719, %v1737
        %v1752 = vmul.f32 %v1017, %v1038
        %v1753 = vmul.f32 %v1019, %v1040
        %v1754 = vmul.f32 %v1725, %v1743
        %v1755 = vld [vmem:[%s3] sm:$0xff]
        %vm1756 = vcmask 195584
        %v1758 = vsel %vm1756, %v1755, 0
        %v1760 = vand.u32 %v1747, 4294901760
        %1761 = vmatprep.subr.mxu0 %v1760
        %v1762 = vand.u32 %v1746, 4294901760
        %1763 = vmatpush1.msra.mxu0 %v1762
        %v1764 = vand.u32 %v1750, 4294901760
        %1765 = vmatprep.subr.mxu0 %v1764
        %v1766 = vand.u32 %v1749, 4294901760
        %1767 = vmatpush1.msra.mxu0 %v1766
        %v1768 = vand.u32 %v1753, 4294901760
        %1769 = vmatprep.subr.mxu0 %v1768
        %v1770 = vand.u32 %v1752, 4294901760
        %1771 = vmatpush1.msra.mxu0 %v1770
        %1772 = vmatprep.subr.mxu0 0.0
        %1773 = vmatpush1.msra.mxu0 0.0
        %1774 = vmatprep.subr.mxu0 0.0
        %1775 = vmatpush1.msra.mxu0 0.0
        %1776 = vmatprep.subr.mxu0 0.0
        %1777 = vmatpush1.msra.mxu0 0.0
        %1778 = vmatprep.subr.mxu0 0.0
        %1779 = vmatpush1.msra.mxu0 0.0
        %1780 = vmatprep.subr.mxu0 0.0
        %1781 = vmatpush1.msra.mxu0 0.0
        %1782 = vmatprep.subr.mxu0 0.0
        %1783 = vmatpush1.msra.mxu0 0.0
        %1784 = vmatprep.subr.mxu0 0.0
        %1785 = vmatpush1.msra.mxu0 0.0
        %1786 = vmatprep.subr.mxu0 0.0
        %1787 = vmatpush1.msra.mxu0 0.0
        %1788 = vmatprep.subr.mxu0 0.0
        %1789 = vmatpush1.msra.mxu0 0.0
        %1790 = vmatprep.subr.mxu0 0.0
        %1791 = vmatpush1.msra.mxu0 0.0
        %1792 = vmatprep.subr.mxu0 0.0
        %1793 = vmatpush1.msra.mxu0 0.0
        %1794 = vmatprep.subr.mxu0 0.0
        %1795 = vmatpush1.msra.mxu0 0.0
        %1796 = vmatprep.subr.mxu0 0.0
        %1797 = vmatpush1.msra.mxu0 0.0
        %1798 = vmatprep.subr.mxu0 0.0
        %1799 = vmatpush1.msra.mxu0 0.0
        %1800 = vmatprep.subr.mxu0 0.0
        %1801 = vmatpush1.msra.mxu0 0.0
        %1802 = vmatprep.subr.mxu0 0.0
        %1803 = vmatpush1.msra.mxu0 0.0
        %1804 = vmatprep.subr.mxu0 0.0
        %1805 = vmatpush1.msra.mxu0 0.0
        %1806 = vmatprep.subr.mxu0 0.0
        %1807 = vmatpush1.msra.mxu0 0.0
        %1808 = vmatprep.subr.mxu0 0.0
        %1809 = vmatpush1.msra.mxu0 0.0
        %1810 = vmatprep.subr.mxu0 0.0
        %1811 = vmatpush1.msra.mxu0 0.0
        %1812 = vmatprep.subr.mxu0 0.0
        %1813 = vmatpush1.msra.mxu0 0.0
        %1814 = vmatprep.subr.mxu0 0.0
        %1815 = vmatpush1.msra.mxu0 0.0
        %1816 = vmatprep.subr.mxu0 0.0
        %1817 = vmatpush1.msra.mxu0 0.0
        %1818 = vmatprep.subr.mxu0 0.0
        %1819 = vmatpush1.msra.mxu0 0.0
        %1820 = vmatprep.subr.mxu0 0.0
        %1821 = vmatpush1.msra.mxu0 0.0
        %1822 = vmatprep.subr.mxu0 0.0
        %1823 = vmatpush1.msra.mxu0 0.0
        %1824 = vmatprep.subr.mxu0 0.0
        %1825 = vmatpush1.msra.mxu0 0.0
        %1826 = vmatprep.subr.mxu0 0.0
        %1827 = vmatpush1.msra.mxu0 0.0
        %1828 = vmatprep.subr.mxu0 0.0
        %1829 = vmatpush1.msra.mxu0 0.0
        %1830 = vmatprep.mubr.f32.mxu0 0.0
        %v1831 = vand.u32 %v1758, 4294901760
        %v1832 = vsub.f32 %v1758, %v1831
        %v1833 = vand.u32 %v1832, 4294901760
        %v1834 = vsub.f32 %v1832, %v1833
        %v1835 = vand.u32 %v1834, 4294901760
        %1836 = vmatmul.mubr.f32.gmra.mrb[0].mxu0 %v1835
        %v1837 = vpop.f32.mrb[0].mxu0
        %v1838 = vadd.f32 0.0, %v1837
        %v1839 = vpop.f32.mrb[0].mxu0
        %v1840 = vadd.f32 0.0, %v1839
        %1841 = vdwg.mxu0
        %v1842 = vand.u32 %v1747, 4294901760
        %v1843 = vsub.f32 %v1747, %v1842
        %v1844 = vand.u32 %v1843, 4294901760
        %v1845 = vsub.f32 %v1843, %v1844
        %v1846 = vand.u32 %v1845, 4294901760
        %1847 = vmatprep.subr.mxu0 %v1846
        %v1848 = vand.u32 %v1746, 4294901760
        %v1849 = vsub.f32 %v1746, %v1848
        %v1850 = vand.u32 %v1849, 4294901760
        %v1851 = vsub.f32 %v1849, %v1850
        %v1852 = vand.u32 %v1851, 4294901760
        %1853 = vmatpush1.msra.mxu0 %v1852
        %v1854 = vand.u32 %v1750, 4294901760
        %v1855 = vsub.f32 %v1750, %v1854
        %v1856 = vand.u32 %v1855, 4294901760
        %v1857 = vsub.f32 %v1855, %v1856
        %v1858 = vand.u32 %v1857, 4294901760
        %1859 = vmatprep.subr.mxu0 %v1858
        %v1860 = vand.u32 %v1749, 4294901760
        %v1861 = vsub.f32 %v1749, %v1860
        %v1862 = vand.u32 %v1861, 4294901760
        %v1863 = vsub.f32 %v1861, %v1862
        %v1864 = vand.u32 %v1863, 4294901760
        %1865 = vmatpush1.msra.mxu0 %v1864
        %v1866 = vand.u32 %v1753, 4294901760
        %v1867 = vsub.f32 %v1753, %v1866
        %v1868 = vand.u32 %v1867, 4294901760
        %v1869 = vsub.f32 %v1867, %v1868
        %v1870 = vand.u32 %v1869, 4294901760
        %1871 = vmatprep.subr.mxu0 %v1870
        %v1872 = vand.u32 %v1752, 4294901760
        %v1873 = vsub.f32 %v1752, %v1872
        %v1874 = vand.u32 %v1873, 4294901760
        %v1875 = vsub.f32 %v1873, %v1874
        %v1876 = vand.u32 %v1875, 4294901760
        %1877 = vmatpush1.msra.mxu0 %v1876
        %1878 = vmatprep.subr.mxu0 0.0
        %1879 = vmatpush1.msra.mxu0 0.0
        %1880 = vmatprep.subr.mxu0 0.0
        %1881 = vmatpush1.msra.mxu0 0.0
        %1882 = vmatprep.subr.mxu0 0.0
        %1883 = vmatpush1.msra.mxu0 0.0
        %1884 = vmatprep.subr.mxu0 0.0
        %1885 = vmatpush1.msra.mxu0 0.0
        %1886 = vmatprep.subr.mxu0 0.0
        %1887 = vmatpush1.msra.mxu0 0.0
        %1888 = vmatprep.subr.mxu0 0.0
        %1889 = vmatpush1.msra.mxu0 0.0
        %1890 = vmatprep.subr.mxu0 0.0
        %1891 = vmatpush1.msra.mxu0 0.0
        %1892 = vmatprep.subr.mxu0 0.0
        %1893 = vmatpush1.msra.mxu0 0.0
        %1894 = vmatprep.subr.mxu0 0.0
        %1895 = vmatpush1.msra.mxu0 0.0
        %1896 = vmatprep.subr.mxu0 0.0
        %1897 = vmatpush1.msra.mxu0 0.0
        %1898 = vmatprep.subr.mxu0 0.0
        %1899 = vmatpush1.msra.mxu0 0.0
        %1900 = vmatprep.subr.mxu0 0.0
        %1901 = vmatpush1.msra.mxu0 0.0
        %1902 = vmatprep.subr.mxu0 0.0
        %1903 = vmatpush1.msra.mxu0 0.0
        %1904 = vmatprep.subr.mxu0 0.0
        %1905 = vmatpush1.msra.mxu0 0.0
        %1906 = vmatprep.subr.mxu0 0.0
        %1907 = vmatpush1.msra.mxu0 0.0
        %1908 = vmatprep.subr.mxu0 0.0
        %1909 = vmatpush1.msra.mxu0 0.0
        %1910 = vmatprep.subr.mxu0 0.0
        %1911 = vmatpush1.msra.mxu0 0.0
        %1912 = vmatprep.subr.mxu0 0.0
        %1913 = vmatpush1.msra.mxu0 0.0
        %1914 = vmatprep.subr.mxu0 0.0
        %1915 = vmatpush1.msra.mxu0 0.0
        %1916 = vmatprep.subr.mxu0 0.0
        %1917 = vmatpush1.msra.mxu0 0.0
        %1918 = vmatprep.subr.mxu0 0.0
        %1919 = vmatpush1.msra.mxu0 0.0
        %1920 = vmatprep.subr.mxu0 0.0
        %1921 = vmatpush1.msra.mxu0 0.0
        %1922 = vmatprep.subr.mxu0 0.0
        %1923 = vmatpush1.msra.mxu0 0.0
        %1924 = vmatprep.subr.mxu0 0.0
        %1925 = vmatpush1.msra.mxu0 0.0
        %1926 = vmatprep.subr.mxu0 0.0
        %1927 = vmatpush1.msra.mxu0 0.0
        %1928 = vmatprep.subr.mxu0 0.0
        %1929 = vmatpush1.msra.mxu0 0.0
        %1930 = vmatprep.subr.mxu0 0.0
        %1931 = vmatpush1.msra.mxu0 0.0
        %1932 = vmatprep.subr.mxu0 0.0
        %1933 = vmatpush1.msra.mxu0 0.0
        %1934 = vmatprep.subr.mxu0 0.0
        %1935 = vmatpush1.msra.mxu0 0.0
        %1936 = vmatprep.mubr.f32.mxu0 0.0
        %v1937 = vand.u32 %v1758, 4294901760
        %1938 = vmatmul.mubr.f32.gmra.mrb[0].mxu0 %v1937
        %v1939 = vpop.f32.mrb[0].mxu0
        %v1940 = vadd.f32 %v1838, %v1939
        %v1941 = vpop.f32.mrb[0].mxu0
        %v1942 = vadd.f32 %v1840, %v1941
        %1943 = vdwg.mxu0
        %v1944 = vand.u32 %v1747, 4294901760
        %v1945 = vsub.f32 %v1747, %v1944
        %1946 = vmatprep.subr.mxu0 %v1945
        %v1947 = vand.u32 %v1746, 4294901760
        %v1948 = vsub.f32 %v1746, %v1947
        %1949 = vmatpush1.msra.mxu0 %v1948
        %v1950 = vand.u32 %v1750, 4294901760
        %v1951 = vsub.f32 %v1750, %v1950
        %1952 = vmatprep.subr.mxu0 %v1951
        %v1953 = vand.u32 %v1749, 4294901760
        %v1954 = vsub.f32 %v1749, %v1953
        %1955 = vmatpush1.msra.mxu0 %v1954
        %v1956 = vand.u32 %v1753, 4294901760
        %v1957 = vsub.f32 %v1753, %v1956
        %1958 = vmatprep.subr.mxu0 %v1957
        %v1959 = vand.u32 %v1752, 4294901760
        %v1960 = vsub.f32 %v1752, %v1959
        %1961 = vmatpush1.msra.mxu0 %v1960
        %1962 = vmatprep.subr.mxu0 0.0
        %1963 = vmatpush1.msra.mxu0 0.0
        %1964 = vmatprep.subr.mxu0 0.0
        %1965 = vmatpush1.msra.mxu0 0.0
        %1966 = vmatprep.subr.mxu0 0.0
        %1967 = vmatpush1.msra.mxu0 0.0
        %1968 = vmatprep.subr.mxu0 0.0
        %1969 = vmatpush1.msra.mxu0 0.0
        %1970 = vmatprep.subr.mxu0 0.0
        %1971 = vmatpush1.msra.mxu0 0.0
        %1972 = vmatprep.subr.mxu0 0.0
        %1973 = vmatpush1.msra.mxu0 0.0
        %1974 = vmatprep.subr.mxu0 0.0
        %1975 = vmatpush1.msra.mxu0 0.0
        %1976 = vmatprep.subr.mxu0 0.0
        %1977 = vmatpush1.msra.mxu0 0.0
        %1978 = vmatprep.subr.mxu0 0.0
        %1979 = vmatpush1.msra.mxu0 0.0
        %1980 = vmatprep.subr.mxu0 0.0
        %1981 = vmatpush1.msra.mxu0 0.0
        %1982 = vmatprep.subr.mxu0 0.0
        %1983 = vmatpush1.msra.mxu0 0.0
        %1984 = vmatprep.subr.mxu0 0.0
        %1985 = vmatpush1.msra.mxu0 0.0
        %1986 = vmatprep.subr.mxu0 0.0
        %1987 = vmatpush1.msra.mxu0 0.0
        %1988 = vmatprep.subr.mxu0 0.0
        %1989 = vmatpush1.msra.mxu0 0.0
        %1990 = vmatprep.subr.mxu0 0.0
        %1991 = vmatpush1.msra.mxu0 0.0
        %1992 = vmatprep.subr.mxu0 0.0
        %1993 = vmatpush1.msra.mxu0 0.0
        %1994 = vmatprep.subr.mxu0 0.0
        %1995 = vmatpush1.msra.mxu0 0.0
        %1996 = vmatprep.subr.mxu0 0.0
        %1997 = vmatpush1.msra.mxu0 0.0
        %1998 = vmatprep.subr.mxu0 0.0
        %1999 = vmatpush1.msra.mxu0 0.0
        %2000 = vmatprep.subr.mxu0 0.0
        %2001 = vmatpush1.msra.mxu0 0.0
        %2002 = vmatprep.subr.mxu0 0.0
        %2003 = vmatpush1.msra.mxu0 0.0
        %2004 = vmatprep.subr.mxu0 0.0
        %2005 = vmatpush1.msra.mxu0 0.0
        %2006 = vmatprep.subr.mxu0 0.0
        %2007 = vmatpush1.msra.mxu0 0.0
        %2008 = vmatprep.subr.mxu0 0.0
        %2009 = vmatpush1.msra.mxu0 0.0
        %2010 = vmatprep.subr.mxu0 0.0
        %2011 = vmatpush1.msra.mxu0 0.0
        %2012 = vmatprep.subr.mxu0 0.0
        %2013 = vmatpush1.msra.mxu0 0.0
        %2014 = vmatprep.subr.mxu0 0.0
        %2015 = vmatpush1.msra.mxu0 0.0
        %2016 = vmatprep.subr.mxu0 0.0
        %2017 = vmatpush1.msra.mxu0 0.0
        %2018 = vmatprep.subr.mxu0 0.0
        %2019 = vmatpush1.msra.mxu0 0.0
        %2020 = vmatprep.mubr.f32.mxu0 0.0
        %v2021 = vand.u32 %v1758, 4294901760
        %v2022 = vsub.f32 %v1758, %v2021
        %2023 = vmatmul.mubr.f32.gmra.mrb[0].mxu0 %v2022
        %v2024 = vpop.f32.mrb[0].mxu0
        %v2025 = vadd.f32 %v1940, %v2024
        %v2026 = vpop.f32.mrb[0].mxu0
        %v2027 = vadd.f32 %v1942, %v2026
        %2028 = vdwg.mxu0
        %v2029 = vand.u32 %v1747, 4294901760
        %2030 = vmatprep.subr.mxu0 %v2029
        %v2031 = vand.u32 %v1746, 4294901760
        %2032 = vmatpush1.msra.mxu0 %v2031
        %v2033 = vand.u32 %v1750, 4294901760
        %2034 = vmatprep.subr.mxu0 %v2033
        %v2035 = vand.u32 %v1749, 4294901760
        %2036 = vmatpush1.msra.mxu0 %v2035
        %v2037 = vand.u32 %v1753, 4294901760
        %2038 = vmatprep.subr.mxu0 %v2037
        %v2039 = vand.u32 %v1752, 4294901760
        %2040 = vmatpush1.msra.mxu0 %v2039
        %2041 = vmatprep.subr.mxu0 0.0
        %2042 = vmatpush1.msra.mxu0 0.0
        %2043 = vmatprep.subr.mxu0 0.0
        %2044 = vmatpush1.msra.mxu0 0.0
        %2045 = vmatprep.subr.mxu0 0.0
        %2046 = vmatpush1.msra.mxu0 0.0
        %2047 = vmatprep.subr.mxu0 0.0
        %2048 = vmatpush1.msra.mxu0 0.0
        %2049 = vmatprep.subr.mxu0 0.0
        %2050 = vmatpush1.msra.mxu0 0.0
        %2051 = vmatprep.subr.mxu0 0.0
        %2052 = vmatpush1.msra.mxu0 0.0
        %2053 = vmatprep.subr.mxu0 0.0
        %2054 = vmatpush1.msra.mxu0 0.0
        %2055 = vmatprep.subr.mxu0 0.0
        %2056 = vmatpush1.msra.mxu0 0.0
        %2057 = vmatprep.subr.mxu0 0.0
        %2058 = vmatpush1.msra.mxu0 0.0
        %2059 = vmatprep.subr.mxu0 0.0
        %2060 = vmatpush1.msra.mxu0 0.0
        %2061 = vmatprep.subr.mxu0 0.0
        %2062 = vmatpush1.msra.mxu0 0.0
        %2063 = vmatprep.subr.mxu0 0.0
        %2064 = vmatpush1.msra.mxu0 0.0
        %2065 = vmatprep.subr.mxu0 0.0
        %2066 = vmatpush1.msra.mxu0 0.0
        %2067 = vmatprep.subr.mxu0 0.0
        %2068 = vmatpush1.msra.mxu0 0.0
        %2069 = vmatprep.subr.mxu0 0.0
        %2070 = vmatpush1.msra.mxu0 0.0
        %2071 = vmatprep.subr.mxu0 0.0
        %2072 = vmatpush1.msra.mxu0 0.0
        %2073 = vmatprep.subr.mxu0 0.0
        %2074 = vmatpush1.msra.mxu0 0.0
        %2075 = vmatprep.subr.mxu0 0.0
        %2076 = vmatpush1.msra.mxu0 0.0
        %2077 = vmatprep.subr.mxu0 0.0
        %2078 = vmatpush1.msra.mxu0 0.0
        %2079 = vmatprep.subr.mxu0 0.0
        %2080 = vmatpush1.msra.mxu0 0.0
        %2081 = vmatprep.subr.mxu0 0.0
        %2082 = vmatpush1.msra.mxu0 0.0
        %2083 = vmatprep.subr.mxu0 0.0
        %2084 = vmatpush1.msra.mxu0 0.0
        %2085 = vmatprep.subr.mxu0 0.0
        %2086 = vmatpush1.msra.mxu0 0.0
        %2087 = vmatprep.subr.mxu0 0.0
        %2088 = vmatpush1.msra.mxu0 0.0
        %2089 = vmatprep.subr.mxu0 0.0
        %2090 = vmatpush1.msra.mxu0 0.0
        %2091 = vmatprep.subr.mxu0 0.0
        %2092 = vmatpush1.msra.mxu0 0.0
        %2093 = vmatprep.subr.mxu0 0.0
        %2094 = vmatpush1.msra.mxu0 0.0
        %2095 = vmatprep.subr.mxu0 0.0
        %2096 = vmatpush1.msra.mxu0 0.0
        %2097 = vmatprep.subr.mxu0 0.0
        %2098 = vmatpush1.msra.mxu0 0.0
        %2099 = vmatprep.mubr.f32.mxu0 0.0
        %v2100 = vand.u32 %v1758, 4294901760
        %v2101 = vsub.f32 %v1758, %v2100
        %v2102 = vand.u32 %v2101, 4294901760
        %2103 = vmatmul.mubr.f32.gmra.mrb[0].mxu0 %v2102
        %v2104 = vpop.f32.mrb[0].mxu0
        %v2105 = vadd.f32 %v2025, %v2104
        %v2106 = vpop.f32.mrb[0].mxu0
        %v2107 = vadd.f32 %v2027, %v2106
        %2108 = vdwg.mxu0
        %v2109 = vand.u32 %v1747, 4294901760
        %v2110 = vsub.f32 %v1747, %v2109
        %v2111 = vand.u32 %v2110, 4294901760
        %2112 = vmatprep.subr.mxu0 %v2111
        %v2113 = vand.u32 %v1746, 4294901760
        %v2114 = vsub.f32 %v1746, %v2113
        %v2115 = vand.u32 %v2114, 4294901760
        %2116 = vmatpush1.msra.mxu0 %v2115
        %v2117 = vand.u32 %v1750, 4294901760
        %v2118 = vsub.f32 %v1750, %v2117
        %v2119 = vand.u32 %v2118, 4294901760
        %2120 = vmatprep.subr.mxu0 %v2119
        %v2121 = vand.u32 %v1749, 4294901760
        %v2122 = vsub.f32 %v1749, %v2121
        %v2123 = vand.u32 %v2122, 4294901760
        %2124 = vmatpush1.msra.mxu0 %v2123
        %v2125 = vand.u32 %v1753, 4294901760
        %v2126 = vsub.f32 %v1753, %v2125
        %v2127 = vand.u32 %v2126, 4294901760
        %2128 = vmatprep.subr.mxu0 %v2127
        %v2129 = vand.u32 %v1752, 4294901760
        %v2130 = vsub.f32 %v1752, %v2129
        %v2131 = vand.u32 %v2130, 4294901760
        %2132 = vmatpush1.msra.mxu0 %v2131
        %2133 = vmatprep.subr.mxu0 0.0
        %2134 = vmatpush1.msra.mxu0 0.0
        %2135 = vmatprep.subr.mxu0 0.0
        %2136 = vmatpush1.msra.mxu0 0.0
        %2137 = vmatprep.subr.mxu0 0.0
        %2138 = vmatpush1.msra.mxu0 0.0
        %2139 = vmatprep.subr.mxu0 0.0
        %2140 = vmatpush1.msra.mxu0 0.0
        %2141 = vmatprep.subr.mxu0 0.0
        %2142 = vmatpush1.msra.mxu0 0.0
        %2143 = vmatprep.subr.mxu0 0.0
        %2144 = vmatpush1.msra.mxu0 0.0
        %2145 = vmatprep.subr.mxu0 0.0
        %2146 = vmatpush1.msra.mxu0 0.0
        %2147 = vmatprep.subr.mxu0 0.0
        %2148 = vmatpush1.msra.mxu0 0.0
        %2149 = vmatprep.subr.mxu0 0.0
        %2150 = vmatpush1.msra.mxu0 0.0
        %2151 = vmatprep.subr.mxu0 0.0
        %2152 = vmatpush1.msra.mxu0 0.0
        %2153 = vmatprep.subr.mxu0 0.0
        %2154 = vmatpush1.msra.mxu0 0.0
        %2155 = vmatprep.subr.mxu0 0.0
        %2156 = vmatpush1.msra.mxu0 0.0
        %2157 = vmatprep.subr.mxu0 0.0
        %2158 = vmatpush1.msra.mxu0 0.0
        %2159 = vmatprep.subr.mxu0 0.0
        %2160 = vmatpush1.msra.mxu0 0.0
        %2161 = vmatprep.subr.mxu0 0.0
        %2162 = vmatpush1.msra.mxu0 0.0
        %2163 = vmatprep.subr.mxu0 0.0
        %2164 = vmatpush1.msra.mxu0 0.0
        %2165 = vmatprep.subr.mxu0 0.0
        %2166 = vmatpush1.msra.mxu0 0.0
        %2167 = vmatprep.subr.mxu0 0.0
        %2168 = vmatpush1.msra.mxu0 0.0
        %2169 = vmatprep.subr.mxu0 0.0
        %2170 = vmatpush1.msra.mxu0 0.0
        %2171 = vmatprep.subr.mxu0 0.0
        %2172 = vmatpush1.msra.mxu0 0.0
        %2173 = vmatprep.subr.mxu0 0.0
        %2174 = vmatpush1.msra.mxu0 0.0
        %2175 = vmatprep.subr.mxu0 0.0
        %2176 = vmatpush1.msra.mxu0 0.0
        %2177 = vmatprep.subr.mxu0 0.0
        %2178 = vmatpush1.msra.mxu0 0.0
        %2179 = vmatprep.subr.mxu0 0.0
        %2180 = vmatpush1.msra.mxu0 0.0
        %2181 = vmatprep.subr.mxu0 0.0
        %2182 = vmatpush1.msra.mxu0 0.0
        %2183 = vmatprep.subr.mxu0 0.0
        %2184 = vmatpush1.msra.mxu0 0.0
        %2185 = vmatprep.subr.mxu0 0.0
        %2186 = vmatpush1.msra.mxu0 0.0
        %2187 = vmatprep.subr.mxu0 0.0
        %2188 = vmatpush1.msra.mxu0 0.0
        %2189 = vmatprep.subr.mxu0 0.0
        %2190 = vmatpush1.msra.mxu0 0.0
        %2191 = vmatprep.mubr.f32.mxu0 0.0
        %v2192 = vand.u32 %v1758, 4294901760
        %2193 = vmatmul.mubr.f32.gmra.mrb[0].mxu0 %v2192
        %v2194 = vpop.f32.mrb[0].mxu0
        %v2195 = vadd.f32 %v2105, %v2194
        %v2196 = vpop.f32.mrb[0].mxu0
        %v2197 = vadd.f32 %v2107, %v2196
        %2198 = vdwg.mxu0
        %v2199 = vand.u32 %v1747, 4294901760
        %2200 = vmatprep.subr.mxu0 %v2199
        %v2201 = vand.u32 %v1746, 4294901760
        %2202 = vmatpush1.msra.mxu0 %v2201
        %v2203 = vand.u32 %v1750, 4294901760
        %2204 = vmatprep.subr.mxu0 %v2203
        %v2205 = vand.u32 %v1749, 4294901760
        %2206 = vmatpush1.msra.mxu0 %v2205
        %v2207 = vand.u32 %v1753, 4294901760
        %2208 = vmatprep.subr.mxu0 %v2207
        %v2209 = vand.u32 %v1752, 4294901760
        %2210 = vmatpush1.msra.mxu0 %v2209
        %2211 = vmatprep.subr.mxu0 0.0
        %2212 = vmatpush1.msra.mxu0 0.0
        %2213 = vmatprep.subr.mxu0 0.0
        %2214 = vmatpush1.msra.mxu0 0.0
        %2215 = vmatprep.subr.mxu0 0.0
        %2216 = vmatpush1.msra.mxu0 0.0
        %2217 = vmatprep.subr.mxu0 0.0
        %2218 = vmatpush1.msra.mxu0 0.0
        %2219 = vmatprep.subr.mxu0 0.0
        %2220 = vmatpush1.msra.mxu0 0.0
        %2221 = vmatprep.subr.mxu0 0.0
        %2222 = vmatpush1.msra.mxu0 0.0
        %2223 = vmatprep.subr.mxu0 0.0
        %2224 = vmatpush1.msra.mxu0 0.0
        %2225 = vmatprep.subr.mxu0 0.0
        %2226 = vmatpush1.msra.mxu0 0.0
        %2227 = vmatprep.subr.mxu0 0.0
        %2228 = vmatpush1.msra.mxu0 0.0
        %2229 = vmatprep.subr.mxu0 0.0
        %2230 = vmatpush1.msra.mxu0 0.0
        %2231 = vmatprep.subr.mxu0 0.0
        %2232 = vmatpush1.msra.mxu0 0.0
        %2233 = vmatprep.subr.mxu0 0.0
        %2234 = vmatpush1.msra.mxu0 0.0
        %2235 = vmatprep.subr.mxu0 0.0
        %2236 = vmatpush1.msra.mxu0 0.0
        %2237 = vmatprep.subr.mxu0 0.0
        %2238 = vmatpush1.msra.mxu0 0.0
        %2239 = vmatprep.subr.mxu0 0.0
        %2240 = vmatpush1.msra.mxu0 0.0
        %2241 = vmatprep.subr.mxu0 0.0
        %2242 = vmatpush1.msra.mxu0 0.0
        %2243 = vmatprep.subr.mxu0 0.0
        %2244 = vmatpush1.msra.mxu0 0.0
        %2245 = vmatprep.subr.mxu0 0.0
        %2246 = vmatpush1.msra.mxu0 0.0
        %2247 = vmatprep.subr.mxu0 0.0
        %2248 = vmatpush1.msra.mxu0 0.0
        %2249 = vmatprep.subr.mxu0 0.0
        %2250 = vmatpush1.msra.mxu0 0.0
        %2251 = vmatprep.subr.mxu0 0.0
        %2252 = vmatpush1.msra.mxu0 0.0
        %2253 = vmatprep.subr.mxu0 0.0
        %2254 = vmatpush1.msra.mxu0 0.0
        %2255 = vmatprep.subr.mxu0 0.0
        %2256 = vmatpush1.msra.mxu0 0.0
        %2257 = vmatprep.subr.mxu0 0.0
        %2258 = vmatpush1.msra.mxu0 0.0
        %2259 = vmatprep.subr.mxu0 0.0
        %2260 = vmatpush1.msra.mxu0 0.0
        %2261 = vmatprep.subr.mxu0 0.0
        %2262 = vmatpush1.msra.mxu0 0.0
        %2263 = vmatprep.subr.mxu0 0.0
        %2264 = vmatpush1.msra.mxu0 0.0
        %2265 = vmatprep.subr.mxu0 0.0
        %2266 = vmatpush1.msra.mxu0 0.0
        %2267 = vmatprep.subr.mxu0 0.0
        %2268 = vmatpush1.msra.mxu0 0.0
        %2269 = vmatprep.mubr.f32.mxu0 0.0
        %v2270 = vand.u32 %v1758, 4294901760
        %2271 = vmatmul.mubr.f32.gmra.mrb[0].mxu0 %v2270
        %v2272 = vpop.f32.mrb[0].mxu0
        %v2273 = vadd.f32 %v2195, %v2272
        %v2274 = vpop.f32.mrb[0].mxu0
        %v2275 = vadd.f32 %v2197, %v2274
        %2276 = vdwg.mxu0
        %2277 = vmatprep.subr.mxu0 0.0
        %v2278 = vand.u32 %v1748, 4294901760
        %2279 = vmatpush1.msra.mxu0 %v2278
        %2280 = vmatprep.subr.mxu0 0.0
        %v2281 = vand.u32 %v1751, 4294901760
        %2282 = vmatpush1.msra.mxu0 %v2281
        %2283 = vmatprep.subr.mxu0 0.0
        %v2284 = vand.u32 %v1754, 4294901760
        %2285 = vmatpush1.msra.mxu0 %v2284
        %2286 = vmatprep.subr.mxu0 0.0
        %2287 = vmatpush1.msra.mxu0 0.0
        %2288 = vmatprep.subr.mxu0 0.0
        %2289 = vmatpush1.msra.mxu0 0.0
        %2290 = vmatprep.subr.mxu0 0.0
        %2291 = vmatpush1.msra.mxu0 0.0
        %2292 = vmatprep.subr.mxu0 0.0
        %2293 = vmatpush1.msra.mxu0 0.0
        %2294 = vmatprep.subr.mxu0 0.0
        %2295 = vmatpush1.msra.mxu0 0.0
        %2296 = vmatprep.subr.mxu0 0.0
        %2297 = vmatpush1.msra.mxu0 0.0
        %2298 = vmatprep.subr.mxu0 0.0
        %2299 = vmatpush1.msra.mxu0 0.0
        %2300 = vmatprep.subr.mxu0 0.0
        %2301 = vmatpush1.msra.mxu0 0.0
        %2302 = vmatprep.subr.mxu0 0.0
        %2303 = vmatpush1.msra.mxu0 0.0
        %2304 = vmatprep.subr.mxu0 0.0
        %2305 = vmatpush1.msra.mxu0 0.0
        %2306 = vmatprep.subr.mxu0 0.0
        %2307 = vmatpush1.msra.mxu0 0.0
        %2308 = vmatprep.subr.mxu0 0.0
        %2309 = vmatpush1.msra.mxu0 0.0
        %2310 = vmatprep.subr.mxu0 0.0
        %2311 = vmatpush1.msra.mxu0 0.0
        %2312 = vmatprep.subr.mxu0 0.0
        %2313 = vmatpush1.msra.mxu0 0.0
        %2314 = vmatprep.subr.mxu0 0.0
        %2315 = vmatpush1.msra.mxu0 0.0
        %2316 = vmatprep.subr.mxu0 0.0
        %2317 = vmatpush1.msra.mxu0 0.0
        %2318 = vmatprep.subr.mxu0 0.0
        %2319 = vmatpush1.msra.mxu0 0.0
        %2320 = vmatprep.subr.mxu0 0.0
        %2321 = vmatpush1.msra.mxu0 0.0
        %2322 = vmatprep.subr.mxu0 0.0
        %2323 = vmatpush1.msra.mxu0 0.0
        %2324 = vmatprep.subr.mxu0 0.0
        %2325 = vmatpush1.msra.mxu0 0.0
        %2326 = vmatprep.subr.mxu0 0.0
        %2327 = vmatpush1.msra.mxu0 0.0
        %2328 = vmatprep.subr.mxu0 0.0
        %2329 = vmatpush1.msra.mxu0 0.0
        %2330 = vmatprep.subr.mxu0 0.0
        %2331 = vmatpush1.msra.mxu0 0.0
        %2332 = vmatprep.subr.mxu0 0.0
        %2333 = vmatpush1.msra.mxu0 0.0
        %2334 = vmatprep.subr.mxu0 0.0
        %2335 = vmatpush1.msra.mxu0 0.0
        %2336 = vmatprep.subr.mxu0 0.0
        %2337 = vmatpush1.msra.mxu0 0.0
        %2338 = vmatprep.subr.mxu0 0.0
        %2339 = vmatpush1.msra.mxu0 0.0
        %2340 = vmatprep.subr.mxu0 0.0
        %2341 = vmatpush1.msra.mxu0 0.0
        %2342 = vmatprep.subr.mxu0 0.0
        %2343 = vmatpush1.msra.mxu0 0.0
        %2344 = vmatprep.mubr.f32.mxu0 0.0
        %v2345 = vand.u32 %v1758, 4294901760
        %v2346 = vsub.f32 %v1758, %v2345
        %v2347 = vand.u32 %v2346, 4294901760
        %v2348 = vsub.f32 %v2346, %v2347
        %v2349 = vand.u32 %v2348, 4294901760
        %2350 = vmatmul.mubr.f32.gmra.mrb[0].mxu0 %v2349
        %v2351 = vpop.f32.mrb[0].mxu0
        %v2352 = vadd.f32 0.0, %v2351
        %v2353 = vpop.f32.mrb[0].mxu0
        %2354 = vdwg.mxu0
        %2355 = vmatprep.subr.mxu0 0.0
        %v2356 = vand.u32 %v1748, 4294901760
        %v2357 = vsub.f32 %v1748, %v2356
        %v2358 = vand.u32 %v2357, 4294901760
        %v2359 = vsub.f32 %v2357, %v2358
        %v2360 = vand.u32 %v2359, 4294901760
        %2361 = vmatpush1.msra.mxu0 %v2360
        %2362 = vmatprep.subr.mxu0 0.0
        %v2363 = vand.u32 %v1751, 4294901760
        %v2364 = vsub.f32 %v1751, %v2363
        %v2365 = vand.u32 %v2364, 4294901760
        %v2366 = vsub.f32 %v2364, %v2365
        %v2367 = vand.u32 %v2366, 4294901760
        %2368 = vmatpush1.msra.mxu0 %v2367
        %2369 = vmatprep.subr.mxu0 0.0
        %v2370 = vand.u32 %v1754, 4294901760
        %v2371 = vsub.f32 %v1754, %v2370
        %v2372 = vand.u32 %v2371, 4294901760
        %v2373 = vsub.f32 %v2371, %v2372
        %v2374 = vand.u32 %v2373, 4294901760
        %2375 = vmatpush1.msra.mxu0 %v2374
        %2376 = vmatprep.subr.mxu0 0.0
        %2377 = vmatpush1.msra.mxu0 0.0
        %2378 = vmatprep.subr.mxu0 0.0
        %2379 = vmatpush1.msra.mxu0 0.0
        %2380 = vmatprep.subr.mxu0 0.0
        %2381 = vmatpush1.msra.mxu0 0.0
        %2382 = vmatprep.subr.mxu0 0.0
        %2383 = vmatpush1.msra.mxu0 0.0
        %2384 = vmatprep.subr.mxu0 0.0
        %2385 = vmatpush1.msra.mxu0 0.0
        %2386 = vmatprep.subr.mxu0 0.0
        %2387 = vmatpush1.msra.mxu0 0.0
        %2388 = vmatprep.subr.mxu0 0.0
        %2389 = vmatpush1.msra.mxu0 0.0
        %2390 = vmatprep.subr.mxu0 0.0
        %2391 = vmatpush1.msra.mxu0 0.0
        %2392 = vmatprep.subr.mxu0 0.0
        %2393 = vmatpush1.msra.mxu0 0.0
        %2394 = vmatprep.subr.mxu0 0.0
        %2395 = vmatpush1.msra.mxu0 0.0
        %2396 = vmatprep.subr.mxu0 0.0
        %2397 = vmatpush1.msra.mxu0 0.0
        %2398 = vmatprep.subr.mxu0 0.0
        %2399 = vmatpush1.msra.mxu0 0.0
        %2400 = vmatprep.subr.mxu0 0.0
        %2401 = vmatpush1.msra.mxu0 0.0
        %2402 = vmatprep.subr.mxu0 0.0
        %2403 = vmatpush1.msra.mxu0 0.0
        %2404 = vmatprep.subr.mxu0 0.0
        %2405 = vmatpush1.msra.mxu0 0.0
        %2406 = vmatprep.subr.mxu0 0.0
        %2407 = vmatpush1.msra.mxu0 0.0
        %2408 = vmatprep.subr.mxu0 0.0
        %2409 = vmatpush1.msra.mxu0 0.0
        %2410 = vmatprep.subr.mxu0 0.0
        %2411 = vmatpush1.msra.mxu0 0.0
        %2412 = vmatprep.subr.mxu0 0.0
        %2413 = vmatpush1.msra.mxu0 0.0
        %2414 = vmatprep.subr.mxu0 0.0
        %2415 = vmatpush1.msra.mxu0 0.0
        %2416 = vmatprep.subr.mxu0 0.0
        %2417 = vmatpush1.msra.mxu0 0.0
        %2418 = vmatprep.subr.mxu0 0.0
        %2419 = vmatpush1.msra.mxu0 0.0
        %2420 = vmatprep.subr.mxu0 0.0
        %2421 = vmatpush1.msra.mxu0 0.0
        %2422 = vmatprep.subr.mxu0 0.0
        %2423 = vmatpush1.msra.mxu0 0.0
        %2424 = vmatprep.subr.mxu0 0.0
        %2425 = vmatpush1.msra.mxu0 0.0
        %2426 = vmatprep.subr.mxu0 0.0
        %2427 = vmatpush1.msra.mxu0 0.0
        %2428 = vmatprep.subr.mxu0 0.0
        %2429 = vmatpush1.msra.mxu0 0.0
        %2430 = vmatprep.subr.mxu0 0.0
        %2431 = vmatpush1.msra.mxu0 0.0
        %2432 = vmatprep.subr.mxu0 0.0
        %2433 = vmatpush1.msra.mxu0 0.0
        %2434 = vmatprep.mubr.f32.mxu0 0.0
        %v2435 = vand.u32 %v1758, 4294901760
        %2436 = vmatmul.mubr.f32.gmra.mrb[0].mxu0 %v2435
        %v2437 = vpop.f32.mrb[0].mxu0
        %v2438 = vadd.f32 %v2352, %v2437
        %v2439 = vpop.f32.mrb[0].mxu0
        %2440 = vdwg.mxu0
        %2441 = vmatprep.subr.mxu0 0.0
        %v2442 = vand.u32 %v1748, 4294901760
        %v2443 = vsub.f32 %v1748, %v2442
        %2444 = vmatpush1.msra.mxu0 %v2443
        %2445 = vmatprep.subr.mxu0 0.0
        %v2446 = vand.u32 %v1751, 4294901760
        %v2447 = vsub.f32 %v1751, %v2446
        %2448 = vmatpush1.msra.mxu0 %v2447
        %2449 = vmatprep.subr.mxu0 0.0
        %v2450 = vand.u32 %v1754, 4294901760
        %v2451 = vsub.f32 %v1754, %v2450
        %2452 = vmatpush1.msra.mxu0 %v2451
        %2453 = vmatprep.subr.mxu0 0.0
        %2454 = vmatpush1.msra.mxu0 0.0
        %2455 = vmatprep.subr.mxu0 0.0
        %2456 = vmatpush1.msra.mxu0 0.0
        %2457 = vmatprep.subr.mxu0 0.0
        %2458 = vmatpush1.msra.mxu0 0.0
        %2459 = vmatprep.subr.mxu0 0.0
        %2460 = vmatpush1.msra.mxu0 0.0
        %2461 = vmatprep.subr.mxu0 0.0
        %2462 = vmatpush1.msra.mxu0 0.0
        %2463 = vmatprep.subr.mxu0 0.0
        %2464 = vmatpush1.msra.mxu0 0.0
        %2465 = vmatprep.subr.mxu0 0.0
        %2466 = vmatpush1.msra.mxu0 0.0
        %2467 = vmatprep.subr.mxu0 0.0
        %2468 = vmatpush1.msra.mxu0 0.0
        %2469 = vmatprep.subr.mxu0 0.0
        %2470 = vmatpush1.msra.mxu0 0.0
        %2471 = vmatprep.subr.mxu0 0.0
        %2472 = vmatpush1.msra.mxu0 0.0
        %2473 = vmatprep.subr.mxu0 0.0
        %2474 = vmatpush1.msra.mxu0 0.0
        %2475 = vmatprep.subr.mxu0 0.0
        %2476 = vmatpush1.msra.mxu0 0.0
        %2477 = vmatprep.subr.mxu0 0.0
        %2478 = vmatpush1.msra.mxu0 0.0
        %2479 = vmatprep.subr.mxu0 0.0
        %2480 = vmatpush1.msra.mxu0 0.0
        %2481 = vmatprep.subr.mxu0 0.0
        %2482 = vmatpush1.msra.mxu0 0.0
        %2483 = vmatprep.subr.mxu0 0.0
        %2484 = vmatpush1.msra.mxu0 0.0
        %2485 = vmatprep.subr.mxu0 0.0
        %2486 = vmatpush1.msra.mxu0 0.0
        %2487 = vmatprep.subr.mxu0 0.0
        %2488 = vmatpush1.msra.mxu0 0.0
        %2489 = vmatprep.subr.mxu0 0.0
        %2490 = vmatpush1.msra.mxu0 0.0
        %2491 = vmatprep.subr.mxu0 0.0
        %2492 = vmatpush1.msra.mxu0 0.0
        %2493 = vmatprep.subr.mxu0 0.0
        %2494 = vmatpush1.msra.mxu0 0.0
        %2495 = vmatprep.subr.mxu0 0.0
        %2496 = vmatpush1.msra.mxu0 0.0
        %2497 = vmatprep.subr.mxu0 0.0
        %2498 = vmatpush1.msra.mxu0 0.0
        %2499 = vmatprep.subr.mxu0 0.0
        %2500 = vmatpush1.msra.mxu0 0.0
        %2501 = vmatprep.subr.mxu0 0.0
        %2502 = vmatpush1.msra.mxu0 0.0
        %2503 = vmatprep.subr.mxu0 0.0
        %2504 = vmatpush1.msra.mxu0 0.0
        %2505 = vmatprep.subr.mxu0 0.0
        %2506 = vmatpush1.msra.mxu0 0.0
        %2507 = vmatprep.subr.mxu0 0.0
        %2508 = vmatpush1.msra.mxu0 0.0
        %2509 = vmatprep.subr.mxu0 0.0
        %2510 = vmatpush1.msra.mxu0 0.0
        %2511 = vmatprep.mubr.f32.mxu0 0.0
        %v2512 = vand.u32 %v1758, 4294901760
        %v2513 = vsub.f32 %v1758, %v2512
        %2514 = vmatmul.mubr.f32.gmra.mrb[0].mxu0 %v2513
        %v2515 = vpop.f32.mrb[0].mxu0
        %v2516 = vadd.f32 %v2438, %v2515
        %v2517 = vpop.f32.mrb[0].mxu0
        %2518 = vdwg.mxu0
        %2519 = vmatprep.subr.mxu0 0.0
        %v2520 = vand.u32 %v1748, 4294901760
        %2521 = vmatpush1.msra.mxu0 %v2520
        %2522 = vmatprep.subr.mxu0 0.0
        %v2523 = vand.u32 %v1751, 4294901760
        %2524 = vmatpush1.msra.mxu0 %v2523
        %2525 = vmatprep.subr.mxu0 0.0
        %v2526 = vand.u32 %v1754, 4294901760
        %2527 = vmatpush1.msra.mxu0 %v2526
        %2528 = vmatprep.subr.mxu0 0.0
        %2529 = vmatpush1.msra.mxu0 0.0
        %2530 = vmatprep.subr.mxu0 0.0
        %2531 = vmatpush1.msra.mxu0 0.0
        %2532 = vmatprep.subr.mxu0 0.0
        %2533 = vmatpush1.msra.mxu0 0.0
        %2534 = vmatprep.subr.mxu0 0.0
        %2535 = vmatpush1.msra.mxu0 0.0
        %2536 = vmatprep.subr.mxu0 0.0
        %2537 = vmatpush1.msra.mxu0 0.0
        %2538 = vmatprep.subr.mxu0 0.0
        %2539 = vmatpush1.msra.mxu0 0.0
        %2540 = vmatprep.subr.mxu0 0.0
        %2541 = vmatpush1.msra.mxu0 0.0
        %2542 = vmatprep.subr.mxu0 0.0
        %2543 = vmatpush1.msra.mxu0 0.0
        %2544 = vmatprep.subr.mxu0 0.0
        %2545 = vmatpush1.msra.mxu0 0.0
        %2546 = vmatprep.subr.mxu0 0.0
        %2547 = vmatpush1.msra.mxu0 0.0
        %2548 = vmatprep.subr.mxu0 0.0
        %2549 = vmatpush1.msra.mxu0 0.0
        %2550 = vmatprep.subr.mxu0 0.0
        %2551 = vmatpush1.msra.mxu0 0.0
        %2552 = vmatprep.subr.mxu0 0.0
        %2553 = vmatpush1.msra.mxu0 0.0
        %2554 = vmatprep.subr.mxu0 0.0
        %2555 = vmatpush1.msra.mxu0 0.0
        %2556 = vmatprep.subr.mxu0 0.0
        %2557 = vmatpush1.msra.mxu0 0.0
        %2558 = vmatprep.subr.mxu0 0.0
        %2559 = vmatpush1.msra.mxu0 0.0
        %2560 = vmatprep.subr.mxu0 0.0
        %2561 = vmatpush1.msra.mxu0 0.0
        %2562 = vmatprep.subr.mxu0 0.0
        %2563 = vmatpush1.msra.mxu0 0.0
        %2564 = vmatprep.subr.mxu0 0.0
        %2565 = vmatpush1.msra.mxu0 0.0
        %2566 = vmatprep.subr.mxu0 0.0
        %2567 = vmatpush1.msra.mxu0 0.0
        %2568 = vmatprep.subr.mxu0 0.0
        %2569 = vmatpush1.msra.mxu0 0.0
        %2570 = vmatprep.subr.mxu0 0.0
        %2571 = vmatpush1.msra.mxu0 0.0
        %2572 = vmatprep.subr.mxu0 0.0
        %2573 = vmatpush1.msra.mxu0 0.0
        %2574 = vmatprep.subr.mxu0 0.0
        %2575 = vmatpush1.msra.mxu0 0.0
        %2576 = vmatprep.subr.mxu0 0.0
        %2577 = vmatpush1.msra.mxu0 0.0
        %2578 = vmatprep.subr.mxu0 0.0
        %2579 = vmatpush1.msra.mxu0 0.0
        %2580 = vmatprep.subr.mxu0 0.0
        %2581 = vmatpush1.msra.mxu0 0.0
        %2582 = vmatprep.subr.mxu0 0.0
        %2583 = vmatpush1.msra.mxu0 0.0
        %2584 = vmatprep.subr.mxu0 0.0
        %2585 = vmatpush1.msra.mxu0 0.0
        %2586 = vmatprep.mubr.f32.mxu0 0.0
        %v2587 = vand.u32 %v1758, 4294901760
        %v2588 = vsub.f32 %v1758, %v2587
        %v2589 = vand.u32 %v2588, 4294901760
        %2590 = vmatmul.mubr.f32.gmra.mrb[0].mxu0 %v2589
        %v2591 = vpop.f32.mrb[0].mxu0
        %v2592 = vadd.f32 %v2516, %v2591
        %v2593 = vpop.f32.mrb[0].mxu0
        %2594 = vdwg.mxu0
        %2595 = vmatprep.subr.mxu0 0.0
        %v2596 = vand.u32 %v1748, 4294901760
        %v2597 = vsub.f32 %v1748, %v2596
        %v2598 = vand.u32 %v2597, 4294901760
        %2599 = vmatpush1.msra.mxu0 %v2598
        %2600 = vmatprep.subr.mxu0 0.0
        %v2601 = vand.u32 %v1751, 4294901760
        %v2602 = vsub.f32 %v1751, %v2601
        %v2603 = vand.u32 %v2602, 4294901760
        %2604 = vmatpush1.msra.mxu0 %v2603
        %2605 = vmatprep.subr.mxu0 0.0
        %v2606 = vand.u32 %v1754, 4294901760
        %v2607 = vsub.f32 %v1754, %v2606
        %v2608 = vand.u32 %v2607, 4294901760
        %2609 = vmatpush1.msra.mxu0 %v2608
        %2610 = vmatprep.subr.mxu0 0.0
        %2611 = vmatpush1.msra.mxu0 0.0
        %2612 = vmatprep.subr.mxu0 0.0
        %2613 = vmatpush1.msra.mxu0 0.0
        %2614 = vmatprep.subr.mxu0 0.0
        %2615 = vmatpush1.msra.mxu0 0.0
        %2616 = vmatprep.subr.mxu0 0.0
        %2617 = vmatpush1.msra.mxu0 0.0
        %2618 = vmatprep.subr.mxu0 0.0
        %2619 = vmatpush1.msra.mxu0 0.0
        %2620 = vmatprep.subr.mxu0 0.0
        %2621 = vmatpush1.msra.mxu0 0.0
        %2622 = vmatprep.subr.mxu0 0.0
        %2623 = vmatpush1.msra.mxu0 0.0
        %2624 = vmatprep.subr.mxu0 0.0
        %2625 = vmatpush1.msra.mxu0 0.0
        %2626 = vmatprep.subr.mxu0 0.0
        %2627 = vmatpush1.msra.mxu0 0.0
        %2628 = vmatprep.subr.mxu0 0.0
        %2629 = vmatpush1.msra.mxu0 0.0
        %2630 = vmatprep.subr.mxu0 0.0
        %2631 = vmatpush1.msra.mxu0 0.0
        %2632 = vmatprep.subr.mxu0 0.0
        %2633 = vmatpush1.msra.mxu0 0.0
        %2634 = vmatprep.subr.mxu0 0.0
        %2635 = vmatpush1.msra.mxu0 0.0
        %2636 = vmatprep.subr.mxu0 0.0
        %2637 = vmatpush1.msra.mxu0 0.0
        %2638 = vmatprep.subr.mxu0 0.0
        %2639 = vmatpush1.msra.mxu0 0.0
        %2640 = vmatprep.subr.mxu0 0.0
        %2641 = vmatpush1.msra.mxu0 0.0
        %2642 = vmatprep.subr.mxu0 0.0
        %2643 = vmatpush1.msra.mxu0 0.0
        %2644 = vmatprep.subr.mxu0 0.0
        %2645 = vmatpush1.msra.mxu0 0.0
        %2646 = vmatprep.subr.mxu0 0.0
        %2647 = vmatpush1.msra.mxu0 0.0
        %2648 = vmatprep.subr.mxu0 0.0
        %2649 = vmatpush1.msra.mxu0 0.0
        %2650 = vmatprep.subr.mxu0 0.0
        %2651 = vmatpush1.msra.mxu0 0.0
        %2652 = vmatprep.subr.mxu0 0.0
        %2653 = vmatpush1.msra.mxu0 0.0
        %2654 = vmatprep.subr.mxu0 0.0
        %2655 = vmatpush1.msra.mxu0 0.0
        %2656 = vmatprep.subr.mxu0 0.0
        %2657 = vmatpush1.msra.mxu0 0.0
        %2658 = vmatprep.subr.mxu0 0.0
        %2659 = vmatpush1.msra.mxu0 0.0
        %2660 = vmatprep.subr.mxu0 0.0
        %2661 = vmatpush1.msra.mxu0 0.0
        %2662 = vmatprep.subr.mxu0 0.0
        %2663 = vmatpush1.msra.mxu0 0.0
        %2664 = vmatprep.subr.mxu0 0.0
        %2665 = vmatpush1.msra.mxu0 0.0
        %2666 = vmatprep.subr.mxu0 0.0
        %2667 = vmatpush1.msra.mxu0 0.0
        %2668 = vmatprep.mubr.f32.mxu0 0.0
        %v2669 = vand.u32 %v1758, 4294901760
        %2670 = vmatmul.mubr.f32.gmra.mrb[0].mxu0 %v2669
        %v2671 = vpop.f32.mrb[0].mxu0
        %v2672 = vadd.f32 %v2592, %v2671
        %v2673 = vpop.f32.mrb[0].mxu0
        %2674 = vdwg.mxu0
        %2675 = vmatprep.subr.mxu0 0.0
        %v2676 = vand.u32 %v1748, 4294901760
        %2677 = vmatpush1.msra.mxu0 %v2676
        %2678 = vmatprep.subr.mxu0 0.0
        %v2679 = vand.u32 %v1751, 4294901760
        %2680 = vmatpush1.msra.mxu0 %v2679
        %2681 = vmatprep.subr.mxu0 0.0
        %v2682 = vand.u32 %v1754, 4294901760
        %2683 = vmatpush1.msra.mxu0 %v2682
        %2684 = vmatprep.subr.mxu0 0.0
        %2685 = vmatpush1.msra.mxu0 0.0
        %2686 = vmatprep.subr.mxu0 0.0
        %2687 = vmatpush1.msra.mxu0 0.0
        %2688 = vmatprep.subr.mxu0 0.0
        %2689 = vmatpush1.msra.mxu0 0.0
        %2690 = vmatprep.subr.mxu0 0.0
        %2691 = vmatpush1.msra.mxu0 0.0
        %2692 = vmatprep.subr.mxu0 0.0
        %2693 = vmatpush1.msra.mxu0 0.0
        %2694 = vmatprep.subr.mxu0 0.0
        %2695 = vmatpush1.msra.mxu0 0.0
        %2696 = vmatprep.subr.mxu0 0.0
        %2697 = vmatpush1.msra.mxu0 0.0
        %2698 = vmatprep.subr.mxu0 0.0
        %2699 = vmatpush1.msra.mxu0 0.0
        %2700 = vmatprep.subr.mxu0 0.0
        %2701 = vmatpush1.msra.mxu0 0.0
        %2702 = vmatprep.subr.mxu0 0.0
        %2703 = vmatpush1.msra.mxu0 0.0
        %2704 = vmatprep.subr.mxu0 0.0
        %2705 = vmatpush1.msra.mxu0 0.0
        %2706 = vmatprep.subr.mxu0 0.0
        %2707 = vmatpush1.msra.mxu0 0.0
        %2708 = vmatprep.subr.mxu0 0.0
        %2709 = vmatpush1.msra.mxu0 0.0
        %2710 = vmatprep.subr.mxu0 0.0
        %2711 = vmatpush1.msra.mxu0 0.0
        %2712 = vmatprep.subr.mxu0 0.0
        %2713 = vmatpush1.msra.mxu0 0.0
        %2714 = vmatprep.subr.mxu0 0.0
        %2715 = vmatpush1.msra.mxu0 0.0
        %2716 = vmatprep.subr.mxu0 0.0
        %2717 = vmatpush1.msra.mxu0 0.0
        %2718 = vmatprep.subr.mxu0 0.0
        %2719 = vmatpush1.msra.mxu0 0.0
        %2720 = vmatprep.subr.mxu0 0.0
        %2721 = vmatpush1.msra.mxu0 0.0
        %2722 = vmatprep.subr.mxu0 0.0
        %2723 = vmatpush1.msra.mxu0 0.0
        %2724 = vmatprep.subr.mxu0 0.0
        %2725 = vmatpush1.msra.mxu0 0.0
        %2726 = vmatprep.subr.mxu0 0.0
        %2727 = vmatpush1.msra.mxu0 0.0
        %2728 = vmatprep.subr.mxu0 0.0
        %2729 = vmatpush1.msra.mxu0 0.0
        %2730 = vmatprep.subr.mxu0 0.0
        %2731 = vmatpush1.msra.mxu0 0.0
        %2732 = vmatprep.subr.mxu0 0.0
        %2733 = vmatpush1.msra.mxu0 0.0
        %2734 = vmatprep.subr.mxu0 0.0
        %2735 = vmatpush1.msra.mxu0 0.0
        %2736 = vmatprep.subr.mxu0 0.0
        %2737 = vmatpush1.msra.mxu0 0.0
        %2738 = vmatprep.subr.mxu0 0.0
        %2739 = vmatpush1.msra.mxu0 0.0
        %2740 = vmatprep.subr.mxu0 0.0
        %2741 = vmatpush1.msra.mxu0 0.0
        %2742 = vmatprep.mubr.f32.mxu0 0.0
        %v2743 = vand.u32 %v1758, 4294901760
        %2744 = vmatmul.mubr.f32.gmra.mrb[0].mxu0 %v2743
        %v2745 = vpop.f32.mrb[0].mxu0
        %v2746 = vadd.f32 %v2672, %v2745
        %v2747 = vpop.f32.mrb[0].mxu0
        %2748 = vdwg.mxu0
        %v2749 = vadd.f32 %v996, %v2273
        %v2750 = vadd.f32 %v998, %v2275
        %v2751 = vadd.f32 %v1707, %v2746
        %2752 = vst [vmem:[%s191] sm:$0xff] %v2749
        %2753 = vst [vmem:[%s191 + $0x8] sm:$0xff] %v2750
        %2754 = vst [vmem:[%s191 + $0x10] sm:$0xff] %v2751
        %s2755 = sand.u32 %s115, 1
        %s2756 = scalar_lea.sflag [#allocation3], %s2755
        %s2757 = sand.u32 %s115, 1
        %s2758 = smul.addr %s2757, 24
        %s2759 = scalar_lea.vmem [#allocation2], %s2758
        // Predicated region
        $region37: #{tpu_custom_call.1} parent=35 // pred_check
          %p2760 = pneg %p125
        $region38: #{tpu_custom_call.1} parent=35 // pred_check_branch
          %2762 = sbr.rel (%p2760) target = $region40
        $region39: #{tpu_custom_call.1} parent=35 // pred_region
          %s2763 = smul.u32 3, %s18
          %s2765 = ssub.s32 384, 384
          %2766 = vsyncadd %s2756, %s2765
          %s2767 = smul.addr %s2763, 128
          %s2768 = scalar_lea.hbm %s4, %s2767
          %s2770 = sshll.u32 %s2759, 4
          %s2771 = int_to_ptr.vmem [resolvable:$true] %s2770
          %2773 = dma.vmem_to_hbm [thread:$0]  %s2771, 384, %s2768, %s2756
        $region40: #{tpu_custom_call.1} parent=35 // pred_fallthru
          _
      $region36: #{tpu_custom_call.1} parent=5 // pred_fallthru
        _
      %p2774 = scmp.le.s32.totalorder 2, %s13
      // Predicated region
      $region41: #{tpu_custom_call.1} parent=5 // pred_check
        %p2775 = pneg %p2774
      $region42: #{tpu_custom_call.1} parent=5 // pred_check_branch
        %2777 = sbr.rel (%p2775) target = $region44
      $region43: #{tpu_custom_call.1} parent=5 // pred_region
        %s2778 = ssub.s32 %s13, 2
        // Predicated region
        $region45: #{tpu_custom_call.1} parent=43 // pred_check
          %p2779 = pneg %p131
        $region46: #{tpu_custom_call.1} parent=43 // pred_check_branch
          %2781 = sbr.rel (%p2779) target = $region48
        $region47: #{tpu_custom_call.1} parent=43 // pred_region
          %s2782 = sand.u32 %s116, 1
          %s2783 = scalar_lea.sflag [#allocation3], %s2782
          %s2784 = sand.u32 %s116, 1
          %s2785 = smul.addr %s2784, 24
          %s2786 = scalar_lea.vmem [#allocation2], %s2785
          %2787 = dma.done %s2783, 384
        $region48: #{tpu_custom_call.1} parent=43 // pred_fallthru
          _
      $region44: #{tpu_custom_call.1} parent=5 // pred_fallthru
        _
    $region6: #{tpu_custom_call.1} parent=1 // loop_footer
      %s17 = sadd.s32 1, %s13
    $region7: #{tpu_custom_call.1} parent=1 // loop_footer_branch
      %12 = sbr.rel target = $region3
    $region8: #{tpu_custom_call.1} parent=1 // loop_exit
      _
    %2788 = vsyncpa [#allocation3], 1
    %s2789 = scalar_lea.sflag [#allocation3], 1
    %2790 = vsyncpa %s2789, 1

</llo_original>
